<compile_context>
chip_gen: v7x
topology: tpu7x:2x2x1
jax: 0.10.0
libtpu: 0.0.40
codegen_flags: <defaults>
</compile_context>

<pallas_src>
import functools

import jax
import jax.numpy as jnp
from jax.experimental import pallas as pl
from jax.experimental.pallas import tpu as pltpu


def _round_up(x, m):
    return ((x + m - 1) // m) * m


@functools.lru_cache(maxsize=None)
def _vmem_capacity_bytes():
    """Per-core VMEM capacity; conservative (v7x) fallback if unavailable."""
    try:
        cap = getattr(pltpu.get_tpu_info(), "vmem_capacity_bytes", None)
        if cap:
            return int(cap)
    except Exception:
        pass
    return 64 * 1024 * 1024


def _vmem_footprint(cc, t, hw_pad, cin):
    """Rough f32 VMEM working set for one (batch, Cout-chunk) group."""
    return 4 * (cc * hw_pad          # ungated-y VMEM scratch (single buffer)
                + 2 * 2 * cin * t    # double-buffered x0/x1 input tiles
                + 2 * cc * t         # double-buffered output tiles
                + 2 * 2 * cc * cin   # double-buffered folded weight chunks
                + 8 * cc)            # bias + sum + gate scratch (padded)


def _choose_tiling(cout, cin, hw, batch, vmem_budget, t_target=8192):
    """Pick (Cout chunk Cc, spatial tile T) so the working set fits the budget."""
    hw_pad0 = _round_up(hw, 128)

    # Spatial-tile candidates (largest first).  Prefer 128-aligned divisors of
    # the 128-padded extent; otherwise accept extra zero-padding up to the tile.
    if hw_pad0 <= t_target:
        t_cands = [hw_pad0]
    else:
        divs = [t for t in range(t_target, 127, -128) if hw_pad0 % t == 0]
        t_cands = [t for t in divs if t >= 1024]
        if not t_cands:
            t_cands = [4096, 2048, 1024] + divs + [128]

    # Cout-chunk candidates: full width first, halve while even.
    cc_cands = []
    cc = cout
    while cc >= 8 and cout % cc == 0:
        cc_cands.append(cc)
        if cc % 2:
            break
        cc //= 2

    for min_t in (min(hw_pad0, 2048), 128):      # prefer big tiles, then relax
        for cc in cc_cands:
            for t in t_cands:
                if t < min_t:
                    continue
                hw_pad = _round_up(hw, t)
                if _vmem_footprint(cc, t, hw_pad, cin) <= vmem_budget:
                    # Give the parallel Cout axis >=2 chunks on batch-1 so both
                    # v7x TensorCores get work (harmless on single-TC v5e/v6e).
                    if batch == 1 and cc == cout and cc >= 16 and cc % 2 == 0:
                        cc //= 2
                    return cc, t
    # TODO(synk): fall back to a two-pass (ungated writeback + gated rescale
    # with input_output_aliases) scheme for resolutions where even the smallest
    # resident-y configuration exceeds VMEM; not needed at bscnet's scales.
    return cc_cands[-1], 128


def _make_kernel(tile_hw, num_t, hw_true, pad_cols):
    inv_hw = 1.0 / float(hw_true)

    def kernel(x0_ref, x1_ref, w0_ref, w1_ref, bias_ref, o_ref,
               y_ref, sum_ref, gate_ref):
        # x0_ref:   (1, C0, T)      activation tile, NCHW-native
        # x1_ref:   (1, C1, T)
        # w0_ref:   (Cc, C0)        folded (BN-scaled) 1x1-conv weight chunk
        # w1_ref:   (Cc, C1)
        # bias_ref: (Cc, 1)         folded BN bias chunk
        # o_ref:    (1, Cc, T)      lane-dense gated output tile
        # y_ref:    (Cc, HWpad)     VMEM scratch: ungated ReLU output
        # sum_ref:  (Cc, 1)         running per-channel sums for the gate
        # gate_ref: (Cc, 1)         sigmoid gate (computed once per group)
        t = pl.program_id(2)

        @pl.when(t == 0)
        def _init():
            sum_ref[...] = jnp.zeros_like(sum_ref)

        # ---- phase 1 (t in [0, NT)): conv1x1 + BN + ReLU, accumulate sums ----
        @pl.when(t < num_t)
        def _compute():
            x0 = x0_ref[0]                                           # (C0, T)
            x1 = x1_ref[0]                                           # (C1, T)
            # 1x1 conv on concatenated channels == two MXU matmuls (no concat).
            y = jnp.dot(w0_ref[...], x0, preferred_element_type=jnp.float32)
            y = y + jnp.dot(w1_ref[...], x1, preferred_element_type=jnp.float32)
            y = y + bias_ref[...]                                    # folded BN bias
            y = jnp.maximum(y, 0.0)                                  # ReLU
            sum_ref[...] += jnp.sum(y, axis=1, keepdims=True)
            start = pl.multiple_of(t * tile_hw, 128)
            y_ref[:, pl.ds(start, tile_hw)] = y

        # ---- gate, computed once after the full spatial reduction ----
        @pl.when(t == num_t)
        def _make_gate():
            s = sum_ref[...]
            if pad_cols:
                # Padded input columns are zero, so each contributes exactly
                # relu(bias) to the per-channel sum; subtract them out.
                s = s - float(pad_cols) * jnp.maximum(bias_ref[...], 0.0)
            gate_ref[...] = jax.nn.sigmoid(s * inv_hw)

        # ---- phase 2 (t in [NT, 2*NT)): gated, lane-dense tiled writeback ----
        @pl.when(t >= num_t)
        def _emit():
            tt = t - num_t
            start = pl.multiple_of(tt * tile_hw, 128)
            o_ref[0] = (y_ref[:, pl.ds(start, tile_hw)]
                        * gate_ref[...]).astype(o_ref.dtype)

    return kernel


@functools.partial(jax.jit, static_argnames=("eps", "tile_hw", "cout_tile"))
def bafm_cff_pallas(x0, x1, conv_w, bn_gamma, bn_beta, bn_mean, bn_var,
                    eps=1e-5, tile_hw=None, cout_tile=None):
    """x0, x1: NCHW tensors with C0 + C1 == conv_w.shape[1]."""
    B, C0, H, W = x0.shape
    C1 = x1.shape[1]
    Cin = C0 + C1
    Cout = conv_w.shape[0]
    HW = H * W

    cap = _vmem_capacity_bytes()
    cc_auto, t_auto = _choose_tiling(Cout, Cin, HW, B, int(0.70 * cap))
    T = t_auto if tile_hw is None else int(tile_hw)
    Cc = cc_auto if cout_tile is None else int(cout_tile)
    assert T % 128 == 0, "spatial tile must be lane-aligned (multiple of 128)"
    assert Cout % Cc == 0 and Cc % 8 == 0, "invalid Cout tile"

    hw_pad = _round_up(HW, T)
    num_t = hw_pad // T
    num_c = Cout // Cc
    pad_cols = hw_pad - HW

    # NCHW -> (B, C, H*W): pure reshape of contiguous memory. Zero-pad the lane
    # axis only when H*W is not tile-aligned (rare for this network).
    x0_r = x0.reshape(B, C0, HW)
    x1_r = x1.reshape(B, C1, HW)
    if pad_cols:
        x0_r = jnp.pad(x0_r, ((0, 0), (0, 0), (0, pad_cols)))
        x1_r = jnp.pad(x1_r, ((0, 0), (0, 0), (0, pad_cols)))

    # Fold BN (inference, running stats) into the 1x1-conv weight + bias:
    #   y = (scale * W) @ x + (beta - mean * scale)
    inv_std = 1.0 / jnp.sqrt(bn_var.astype(jnp.float32) + eps)
    scale = (bn_gamma.astype(jnp.float32) * inv_std)                 # (Cout,)
    bias = (bn_beta.astype(jnp.float32)
            - bn_mean.astype(jnp.float32) * scale)                   # (Cout,)
    w = conv_w.reshape(Cout, Cin).astype(jnp.float32) * scale[:, None]
    w0 = w[:, :C0]                                                   # (Cout, C0)
    w1 = w[:, C0:]                                                   # (Cout, C1)
    bias2d = bias.reshape(Cout, 1)

    kernel = _make_kernel(T, num_t, HW, pad_cols)

    fp = _vmem_footprint(Cc, T, hw_pad, Cin)
    vmem_limit = int(min(max(2 * fp, 32 * 1024 * 1024), int(0.85 * cap)))

    out = pl.pallas_call(
        kernel,
        out_shape=jax.ShapeDtypeStruct((B, Cout, hw_pad), x0.dtype),
        grid_spec=pltpu.PrefetchScalarGridSpec(
            num_scalar_prefetch=0,
            grid=(B, num_c, 2 * num_t),
            in_specs=[
                # Inputs are only consumed during the compute phase; clamp the
                # spatial index during the gate phase so no tile is re-fetched.
                pl.BlockSpec((1, C0, T),
                             lambda b, c, t: (b, 0, jnp.minimum(t, num_t - 1))),
                pl.BlockSpec((1, C1, T),
                             lambda b, c, t: (b, 0, jnp.minimum(t, num_t - 1))),
                pl.BlockSpec((Cc, C0), lambda b, c, t: (c, 0)),
                pl.BlockSpec((Cc, C1), lambda b, c, t: (c, 0)),
                pl.BlockSpec((Cc, 1), lambda b, c, t: (c, 0)),
            ],
            # Output is only written during the gate phase; hold block 0 during
            # the compute phase so writebacks only start once tiles are gated.
            out_specs=pl.BlockSpec((1, Cc, T),
                                   lambda b, c, t: (b, c, jnp.maximum(t - num_t, 0))),
            scratch_shapes=[
                pltpu.VMEM((Cc, hw_pad), jnp.float32),   # ungated y
                pltpu.VMEM((Cc, 1), jnp.float32),        # per-channel sums
                pltpu.VMEM((Cc, 1), jnp.float32),        # sigmoid gate
            ],
        ),
        compiler_params=pltpu.CompilerParams(
            dimension_semantics=("parallel", "parallel", "arbitrary"),
            vmem_limit_bytes=vmem_limit,
        ),
    )(x0_r, x1_r, w0, w1, bias2d)

    if pad_cols:
        out = out[:, :, :HW]
    return out.reshape(B, Cout, H, W)


def bafm_cff_reference(x0, x1, conv_w, bn_gamma, bn_beta, bn_mean, bn_var, eps=1e-5):
    """Pure-JAX reference mirroring the PyTorch forward (NCHW, inference BN)."""
    x = jnp.concatenate([x0, x1], axis=1)                            # (B, Cin, H, W)
    y = jnp.einsum("bchw,oc->bohw", x, conv_w.reshape(conv_w.shape[0], -1))
    inv_std = 1.0 / jnp.sqrt(bn_var + eps)
    y = y * (bn_gamma * inv_std)[None, :, None, None] + (
        bn_beta - bn_mean * bn_gamma * inv_std)[None, :, None, None]
    y = jnp.maximum(y, 0.0)
    gate = jax.nn.sigmoid(jnp.mean(y, axis=(2, 3), keepdims=True))
    return y * gate


if __name__ == "__main__":
    key = jax.random.PRNGKey(0)
    # Module requires 192 concatenated channels: x[0]=x_backbone (128), x[1]=x_s (64).
    B, C0, C1, H, W = 2, 128, 64, 16, 16
    Cout = 128

    k0, k1, k2 = jax.random.split(key, 3)
    x0 = jax.random.normal(k0, (B, C0, H, W), dtype=jnp.float32)
    x1 = jax.random.normal(k1, (B, C1, H, W), dtype=jnp.float32)

    # Deterministic synthetic parameters (shapes from the module's __init__).
    conv_w = 0.05 * jax.random.normal(k2, (Cout, C0 + C1, 1, 1), dtype=jnp.float32)
    idx = jnp.arange(Cout, dtype=jnp.float32)
    bn_gamma = 1.0 + 0.1 * jnp.sin(idx)
    bn_beta = 0.05 * jnp.cos(idx)
    bn_mean = 0.01 * idx
    bn_var = 1.0 + 0.02 * idx

    ref = bafm_cff_reference(x0, x1, conv_w, bn_gamma, bn_beta, bn_mean, bn_var)

    # 1) Auto-tiled path (VMEM-budget-driven tile / Cout-chunk selection).
    out1 = jax.block_until_ready(
        bafm_cff_pallas(x0, x1, conv_w, bn_gamma, bn_beta, bn_mean, bn_var))
    assert out1.shape == (B, Cout, H, W)
    assert jnp.allclose(out1, ref, atol=1e-4, rtol=1e-4)

    # 2) Forced multi-tile spatial axis + Cout split: exercises the scratch
    #    accumulation, the overlapped gated writeback, and the parallel Cout axis.
    out2 = jax.block_until_ready(
        bafm_cff_pallas(x0, x1, conv_w, bn_gamma, bn_beta, bn_mean, bn_var,
                        tile_hw=128, cout_tile=64))
    assert jnp.allclose(out2, ref, atol=1e-4, rtol=1e-4)

    # 3) Non-lane-aligned spatial size: exercises the zero-padded tail and the
    #    exact pad correction of the global-average-pool gate.
    Hs, Ws = 10, 10
    x0s = jax.random.normal(k0, (B, C0, Hs, Ws), dtype=jnp.float32)
    x1s = jax.random.normal(k1, (B, C1, Hs, Ws), dtype=jnp.float32)
    refs = bafm_cff_reference(x0s, x1s, conv_w, bn_gamma, bn_beta, bn_mean, bn_var)
    out3 = jax.block_until_ready(
        bafm_cff_pallas(x0s, x1s, conv_w, bn_gamma, bn_beta, bn_mean, bn_var))
    assert out3.shape == (B, Cout, Hs, Ws)
    assert jnp.allclose(out3, refs, atol=1e-4, rtol=1e-4)

    print("KERNEL_OK")
</pallas_src>

<mosaic_0001>
module attributes {stable_mosaic.version = 11 : i64} {
  func.func @kernel(%arg0: i32, %arg1: i32, %arg2: i32, %arg3: memref<1x128x256xf32, #tpu.memory_space<vmem>>, %arg4: memref<1x64x256xf32, #tpu.memory_space<vmem>>, %arg5: memref<128x128xf32, #tpu.memory_space<vmem>>, %arg6: memref<128x64xf32, #tpu.memory_space<vmem>>, %arg7: memref<128x1xf32, #tpu.memory_space<vmem>>, %arg8: memref<1x128x256xf32, #tpu.memory_space<vmem>>, %arg9: memref<128x256xf32, #tpu.memory_space<vmem>>, %arg10: memref<128x1xf32, #tpu.memory_space<vmem>>, %arg11: memref<128x1xf32, #tpu.memory_space<vmem>>) attributes {dimension_semantics = [#tpu.dimension_semantics<parallel>, #tpu.dimension_semantics<parallel>, #tpu.dimension_semantics<arbitrary>], iteration_bounds = array<i64: 2, 1, 2>, scalar_prefetch = 0 : i64, scratch_operands = 3 : i64, tpu.core_type = #tpu.core_type<tc>, window_params = [{transform_indices = @transform_0, window_bounds = array<i64: 1, 128, 256>}, {transform_indices = @transform_1, window_bounds = array<i64: 1, 64, 256>}, {transform_indices = @transform_2, window_bounds = array<i64: 128, 128>}, {transform_indices = @transform_3, window_bounds = array<i64: 128, 64>}, {transform_indices = @transform_4, window_bounds = array<i64: 128, 1>}, {transform_indices = @transform_5, window_bounds = array<i64: 1, 128, 256>}]} {
    %c0_i32 = arith.constant 0 : i32
    %0 = arith.cmpi eq, %arg2, %c0_i32 : i32
    %1 = arith.extui %0 : i1 to i32
    %c0_i32_0 = arith.constant 0 : i32
    %2 = arith.cmpi ne, %1, %c0_i32_0 : i32
    scf.if %2 {
      %cst = arith.constant 0.000000e+00 : f32
      %12 = vector.broadcast %cst : f32 to vector<128x1xf32>
      %c0 = arith.constant 0 : index
      %c0_6 = arith.constant 0 : index
      %13 = vector.load %arg10[%c0, %c0_6] : memref<128x1xf32, #tpu.memory_space<vmem>>, vector<128x1xf32>
      tpu.vector_store %arg10[%c0, %c0_6], %12 {strides = array<i32>} : memref<128x1xf32, #tpu.memory_space<vmem>>, vector<128x1xf32>,
    } else {
    }
    %c1_i32 = arith.constant 1 : i32
    %3 = arith.cmpi slt, %arg2, %c1_i32 : i32
    %4 = arith.extui %3 : i1 to i32
    %c0_i32_1 = arith.constant 0 : i32
    %5 = arith.cmpi ne, %4, %c0_i32_1 : i32
    scf.if %5 {
      %c0 = arith.constant 0 : index
      %c0_6 = arith.constant 0 : index
      %c0_7 = arith.constant 0 : index
      %12 = vector.load %arg3[%c0, %c0_6, %c0_7] : memref<1x128x256xf32, #tpu.memory_space<vmem>>, vector<1x128x256xf32>
      %13 = vector.shape_cast %12 : vector<1x128x256xf32> to vector<128x256xf32>
      %c0_8 = arith.constant 0 : index
      %c0_9 = arith.constant 0 : index
      %c0_10 = arith.constant 0 : index
      %14 = vector.load %arg4[%c0_8, %c0_9, %c0_10] : memref<1x64x256xf32, #tpu.memory_space<vmem>>, vector<1x64x256xf32>
      %15 = vector.shape_cast %14 : vector<1x64x256xf32> to vector<64x256xf32>
      %c0_11 = arith.constant 0 : index
      %c0_12 = arith.constant 0 : index
      %16 = vector.load %arg5[%c0_11, %c0_12] : memref<128x128xf32, #tpu.memory_space<vmem>>, vector<128x128xf32>
      %cst = arith.constant dense<0.000000e+00> : vector<128x256xf32>
      %17 = tpu.matmul %16, %13, %cst {dimension_numbers = #tpu.dot_dimension_numbers<[1], [0], [0], [1], [0, 0, 1, 1], [], []>} : vector<128x128xf32>, vector<128x256xf32>, vector<128x256xf32> -> vector<128x256xf32>
      %c0_13 = arith.constant 0 : index
      %c0_14 = arith.constant 0 : index
      %18 = vector.load %arg6[%c0_13, %c0_14] : memref<128x64xf32, #tpu.memory_space<vmem>>, vector<128x64xf32>
      %cst_15 = arith.constant dense<0.000000e+00> : vector<128x256xf32>
      %19 = tpu.matmul %18, %15, %cst_15 {dimension_numbers = #tpu.dot_dimension_numbers<[1], [0], [0], [1], [0, 0, 1, 1], [], []>} : vector<128x64xf32>, vector<64x256xf32>, vector<128x256xf32> -> vector<128x256xf32>
      %20 = arith.addf %17, %19 : vector<128x256xf32>
      %c0_16 = arith.constant 0 : index
      %c0_17 = arith.constant 0 : index
      %21 = vector.load %arg7[%c0_16, %c0_17] : memref<128x1xf32, #tpu.memory_space<vmem>>, vector<128x1xf32>
      %22 = vector.broadcast %21 : vector<128x1xf32> to vector<128x256xf32>
      %23 = arith.addf %20, %22 : vector<128x256xf32>
      %cst_18 = arith.constant 0.000000e+00 : f32
      %24 = vector.broadcast %cst_18 : f32 to vector<128x256xf32>
      %25 = arith.maximumf %23, %24 : vector<128x256xf32>
      %c0_19 = arith.constant 0 : index
      %c0_20 = arith.constant 0 : index
      %26 = vector.load %arg10[%c0_19, %c0_20] : memref<128x1xf32, #tpu.memory_space<vmem>>, vector<128x1xf32>
      %cst_21 = arith.constant dense<0.000000e+00> : vector<128xf32>
      %27 = vector.multi_reduction <add>, %25, %cst_21 [1] : vector<128x256xf32> to vector<128xf32>
      %28 = vector.shape_cast %27 : vector<128xf32> to vector<128x1xf32>
      %29 = arith.addf %26, %28 : vector<128x1xf32>
      %c0_22 = arith.constant 0 : index
      %c0_23 = arith.constant 0 : index
      %30 = vector.load %arg10[%c0_22, %c0_23] : memref<128x1xf32, #tpu.memory_space<vmem>>, vector<128x1xf32>
      tpu.vector_store %arg10[%c0_22, %c0_23], %29 {strides = array<i32>} : memref<128x1xf32, #tpu.memory_space<vmem>>, vector<128x1xf32>,
      %c256_i32 = arith.constant 256 : i32
      %31 = arith.muli %arg2, %c256_i32 : i32
      %32 = tpu.assume_multiple %31, 128 : i32
      %c0_24 = arith.constant 0 : index
      %33 = arith.index_cast %32 : i32 to index
      %34 = vector.load %arg9[%c0_24, %33] : memref<128x256xf32, #tpu.memory_space<vmem>>, vector<128x256xf32>
      tpu.vector_store %arg9[%c0_24, %33], %25 {strides = array<i32>} : memref<128x256xf32, #tpu.memory_space<vmem>>, vector<128x256xf32>,
    } else {
    }
    %c1_i32_2 = arith.constant 1 : i32
    %6 = arith.cmpi eq, %arg2, %c1_i32_2 : i32
    %7 = arith.extui %6 : i1 to i32
    %c0_i32_3 = arith.constant 0 : i32
    %8 = arith.cmpi ne, %7, %c0_i32_3 : i32
    scf.if %8 {
      %c0 = arith.constant 0 : index
      %c0_6 = arith.constant 0 : index
      %12 = vector.load %arg10[%c0, %c0_6] : memref<128x1xf32, #tpu.memory_space<vmem>>, vector<128x1xf32>
      %cst = arith.constant 3.906250e-03 : f32
      %13 = vector.broadcast %cst : f32 to vector<128x1xf32>
      %14 = arith.mulf %12, %13 : vector<128x1xf32>
      %15 = arith.negf %14 : vector<128x1xf32>
      %16 = math.exp %15 : vector<128x1xf32>
      %cst_7 = arith.constant 1.000000e+00 : f32
      %17 = vector.broadcast %cst_7 : f32 to vector<128x1xf32>
      %18 = arith.addf %17, %16 : vector<128x1xf32>
      %19 = arith.divf %17, %18 : vector<128x1xf32>
      %c0_8 = arith.constant 0 : index
      %c0_9 = arith.constant 0 : index
      %20 = vector.load %arg11[%c0_8, %c0_9] : memref<128x1xf32, #tpu.memory_space<vmem>>, vector<128x1xf32>
      tpu.vector_store %arg11[%c0_8, %c0_9], %19 {strides = array<i32>} : memref<128x1xf32, #tpu.memory_space<vmem>>, vector<128x1xf32>,
    } else {
    }
    %c1_i32_4 = arith.constant 1 : i32
    %9 = arith.cmpi sge, %arg2, %c1_i32_4 : i32
    %10 = arith.extui %9 : i1 to i32
    %c0_i32_5 = arith.constant 0 : i32
    %11 = arith.cmpi ne, %10, %c0_i32_5 : i32
    scf.if %11 {
      %c1_i32_6 = arith.constant 1 : i32
      %12 = arith.subi %arg2, %c1_i32_6 : i32
      %c256_i32 = arith.constant 256 : i32
      %13 = arith.muli %12, %c256_i32 : i32
      %14 = tpu.assume_multiple %13, 128 : i32
      %c0 = arith.constant 0 : index
      %15 = arith.index_cast %14 : i32 to index
      %16 = vector.load %arg9[%c0, %15] : memref<128x256xf32, #tpu.memory_space<vmem>>, vector<128x256xf32>
      %c0_7 = arith.constant 0 : index
      %c0_8 = arith.constant 0 : index
      %17 = vector.load %arg11[%c0_7, %c0_8] : memref<128x1xf32, #tpu.memory_space<vmem>>, vector<128x1xf32>
      %18 = vector.broadcast %17 : vector<128x1xf32> to vector<128x256xf32>
      %19 = arith.mulf %16, %18 : vector<128x256xf32>
      %c0_9 = arith.constant 0 : index
      %c0_10 = arith.constant 0 : index
      %c0_11 = arith.constant 0 : index
      %20 = vector.load %arg8[%c0_9, %c0_10, %c0_11] : memref<1x128x256xf32, #tpu.memory_space<vmem>>, vector<1x128x256xf32>
      %21 = vector.shape_cast %20 : vector<1x128x256xf32> to vector<128x256xf32>
      %22 = vector.shape_cast %19 : vector<128x256xf32> to vector<1x128x256xf32>
      tpu.vector_store %arg8[%c0_9, %c0_10, %c0_11], %22 {strides = array<i32>} : memref<1x128x256xf32, #tpu.memory_space<vmem>>, vector<1x128x256xf32>,
    } else {
    }
    return
  }
  func.func @transform_0(%arg0: i32, %arg1: i32, %arg2: i32) -> (i32, i32, i32) {
    %c0_i32 = arith.constant 0 : i32
    %0 = arith.minsi %arg2, %c0_i32 : i32
    %c0_i32_0 = arith.constant 0 : i32
    %c0_i32_1 = arith.constant 0 : i32
    return %arg0, %c0_i32_0, %0 : i32, i32, i32
  }
  func.func @transform_1(%arg0: i32, %arg1: i32, %arg2: i32) -> (i32, i32, i32) {
    %c0_i32 = arith.constant 0 : i32
    %0 = arith.minsi %arg2, %c0_i32 : i32
    %c0_i32_0 = arith.constant 0 : i32
    %c0_i32_1 = arith.constant 0 : i32
    return %arg0, %c0_i32_0, %0 : i32, i32, i32
  }
  func.func @transform_2(%arg0: i32, %arg1: i32, %arg2: i32) -> (i32, i32) {
    %c0_i32 = arith.constant 0 : i32
    %c0_i32_0 = arith.constant 0 : i32
    return %arg1, %c0_i32 : i32, i32
  }
  func.func @transform_3(%arg0: i32, %arg1: i32, %arg2: i32) -> (i32, i32) {
    %c0_i32 = arith.constant 0 : i32
    %c0_i32_0 = arith.constant 0 : i32
    return %arg1, %c0_i32 : i32, i32
  }
  func.func @transform_4(%arg0: i32, %arg1: i32, %arg2: i32) -> (i32, i32) {
    %c0_i32 = arith.constant 0 : i32
    %c0_i32_0 = arith.constant 0 : i32
    return %arg1, %c0_i32 : i32, i32
  }
  func.func @transform_5(%arg0: i32, %arg1: i32, %arg2: i32) -> (i32, i32, i32) {
    %c1_i32 = arith.constant 1 : i32
    %0 = arith.subi %arg2, %c1_i32 : i32
    %c0_i32 = arith.constant 0 : i32
    %1 = arith.maxsi %0, %c0_i32 : i32
    %c0_i32_0 = arith.constant 0 : i32
    return %arg0, %arg1, %1 : i32, i32, i32
  }
}

</mosaic_0001>

<llo_original>
// kernel: bafm_cff_pallas.1
$region0: #{bafm_cff_pallas.1}
  #allocation0 [shape = 'u32[]', space=smem, size = 0x4, offset = 0x4, fixed_abs, tag = 'smem constant byte address 0x4 - core index']
  #allocation1 [shape = 'u32[144,128]{1,0:T(1,128)}', space=vmem, size = 0x12000, scoped, tag = 'internal scratch']
  #allocation2 [shape = 'f32[128,256]{1,0:T(8,128)}', space=vmem, size = 0x20000, scoped, tag = 'scratch operand']
  #allocation3 [shape = 'f32[128,1]{1,0:T(8,128)}', space=vmem, size = 0x10000, scoped, tag = 'scratch operand']
  #allocation4 [shape = 'f32[128,1]{1,0:T(8,128)}', space=vmem, size = 0x10000, scoped, tag = 'scratch operand']
  %s0 = inlined_call_operand.vmem [shape: f32[2,128,256], index: 0, kind: input, shape index: {}]
  %s1 = inlined_call_operand.vmem [shape: f32[2,64,256], index: 1, kind: input, shape index: {}]
  %s2 = inlined_call_operand.vmem [shape: f32[128,128], index: 2, kind: input, shape index: {}]
  %s3 = inlined_call_operand.vmem [shape: f32[128,64], index: 3, kind: input, shape index: {}]
  %s4 = inlined_call_operand.vmem [shape: f32[128,1], index: 4, kind: input, shape index: {}]
  %s5 = inlined_call_operand.vmem [shape: f32[2,128,256], index: 5, kind: output, shape index: {}]
  %s6 = sld [smem:[#allocation0]]
  $region69: #{bafm_cff_pallas.1} parent=0
    _
  %s8 = ssub.s32 1, %s6
  %s9 = scalar_select 0, %s8, %s6
  loop: start=0, step=1, limit=6
  $region2: #{bafm_cff_pallas.1} parent=0 // loop_pre_header
    _
  $region3: #{bafm_cff_pallas.1} parent=0 // loop_header
    %s11 = sphi 0, %s15
    %p12 = scmp.ge.s32.totalorder %s11, 6
    %s18 = sphi 0, %s37
    %s19 = sphi 0, %s33
    %s20 = sphi 0, %s29
    %s21 = sphi 0, %s18
    %s22 = sphi 0, %s19
    %s23 = sphi 0, %s20
    %s24 = sphi 0, %s21
    %s25 = sphi 0, %s22
    %s26 = sphi 0, %s23
    %s46 = sphi 0, %s48
    %s49 = sphi 0, %s46
    %s50 = sphi 0, %s49
    %s66 = sphi 0, %s50
    %s78 = sphi 0, %s80
    %s81 = sphi 0, %s78
    %s82 = sphi 0, %s81
    %s98 = sphi 0, %s82
    %s104 = sphi 0, %s106
    %s107 = sphi 0, %s104
    %s108 = sphi 0, %s107
    %s124 = sphi 0, %s108
    %s130 = sphi 0, %s132
    %s133 = sphi 0, %s130
    %s134 = sphi 0, %s133
    %s150 = sphi 0, %s134
    %s156 = sphi 0, %s158
    %s159 = sphi 0, %s156
    %s160 = sphi 0, %s159
    %s176 = sphi 0, %s160
    %s192 = sphi 0, %s194
    %s195 = sphi 0, %s192
    %s196 = sphi 0, %s195
    %s212 = sphi 0, %s196
  $region4: #{bafm_cff_pallas.1} parent=0 // loop_header_branch
    %14 = sbr.rel (%p12) target = $region8
  $region5: #{bafm_cff_pallas.1} parent=0 // loop_body
    %s16 = ssub.s32 %s11, 1
    %s17 = ssub.s32 %s11, 2
    %s27 = sadd.s32 1, %s20
    %p28 = scmp.ge.s32.totalorder %s27, 2
    %s29 = scalar_select %p28, 0, %s27
    %s30 = sadd.s32 1, %s19
    %s31 = scalar_select %p28, %s30, %s19
    %p32 = scmp.ge.s32.totalorder %s31, 1
    %s33 = scalar_select %p32, 0, %s31
    %s34 = sadd.s32 1, %s18
    %s35 = scalar_select %p32, %s34, %s18
    %p36 = scmp.ge.s32.totalorder %s35, 2
    %s37 = scalar_select %p36, 0, %s35
    %p38 = scmp.lt.s32.totalorder %s20, 0
    %s39 = scalar_select %p38, %s20, 0
    %p40 = scmp.lt.s32.totalorder %s29, 0
    %s41 = scalar_select %p40, %s29, 0
    %s42 = ssub.s32 %s18, %s37
    %s43 = ssub.s32 %s39, %s41
    %s44 = sor.u32 %s42, %s43
    %p45 = scmp.eq.s32.totalorder %s44, 0
    %s47 = sadd.s32 %s46, 1
    %s48 = scalar_select %p45, %s46, %s47
    %p51 = pneg %p45
    %p52 = scmp.eq.s32.totalorder %s11, 3
    %p53 = por %p51, %p52
    %p54 = scmp.ne.s32.totalorder %s46, %s49
    %p55 = scmp.eq.s32.totalorder %s11, 0
    %p56 = por %p54, %p55
    %p57 = scmp.ne.s32.totalorder %s46, %s49
    %p58 = scmp.eq.s32.totalorder %s16, 3
    %p59 = por %p57, %p58
    %p60 = scmp.ne.s32.totalorder %s49, %s50
    %p61 = scmp.eq.s32.totalorder %s16, 0
    %p62 = por %p60, %p61
    %p63 = scmp.ne.s32.totalorder %s49, %s50
    %p64 = scmp.eq.s32.totalorder %s17, 3
    %p65 = por %p63, %p64
    %p67 = scmp.ne.s32.totalorder %s50, %s66
    %p68 = scmp.eq.s32.totalorder %s17, 0
    %p69 = por %p67, %p68
    %p70 = scmp.lt.s32.totalorder %s20, 0
    %s71 = scalar_select %p70, %s20, 0
    %p72 = scmp.lt.s32.totalorder %s29, 0
    %s73 = scalar_select %p72, %s29, 0
    %s74 = ssub.s32 %s18, %s37
    %s75 = ssub.s32 %s71, %s73
    %s76 = sor.u32 %s74, %s75
    %p77 = scmp.eq.s32.totalorder %s76, 0
    %s79 = sadd.s32 %s78, 1
    %s80 = scalar_select %p77, %s78, %s79
    %p83 = pneg %p77
    %p84 = scmp.eq.s32.totalorder %s11, 3
    %p85 = por %p83, %p84
    %p86 = scmp.ne.s32.totalorder %s78, %s81
    %p87 = scmp.eq.s32.totalorder %s11, 0
    %p88 = por %p86, %p87
    %p89 = scmp.ne.s32.totalorder %s78, %s81
    %p90 = scmp.eq.s32.totalorder %s16, 3
    %p91 = por %p89, %p90
    %p92 = scmp.ne.s32.totalorder %s81, %s82
    %p93 = scmp.eq.s32.totalorder %s16, 0
    %p94 = por %p92, %p93
    %p95 = scmp.ne.s32.totalorder %s81, %s82
    %p96 = scmp.eq.s32.totalorder %s17, 3
    %p97 = por %p95, %p96
    %p99 = scmp.ne.s32.totalorder %s82, %s98
    %p100 = scmp.eq.s32.totalorder %s17, 0
    %p101 = por %p99, %p100
    %s102 = ssub.s32 %s19, %s33
    %p103 = scmp.eq.s32.totalorder %s102, 0
    %s105 = sadd.s32 %s104, 1
    %s106 = scalar_select %p103, %s104, %s105
    %p109 = pneg %p103
    %p110 = scmp.eq.s32.totalorder %s11, 3
    %p111 = por %p109, %p110
    %p112 = scmp.ne.s32.totalorder %s104, %s107
    %p113 = scmp.eq.s32.totalorder %s11, 0
    %p114 = por %p112, %p113
    %p115 = scmp.ne.s32.totalorder %s104, %s107
    %p116 = scmp.eq.s32.totalorder %s16, 3
    %p117 = por %p115, %p116
    %p118 = scmp.ne.s32.totalorder %s107, %s108
    %p119 = scmp.eq.s32.totalorder %s16, 0
    %p120 = por %p118, %p119
    %p121 = scmp.ne.s32.totalorder %s107, %s108
    %p122 = scmp.eq.s32.totalorder %s17, 3
    %p123 = por %p121, %p122
    %p125 = scmp.ne.s32.totalorder %s108, %s124
    %p126 = scmp.eq.s32.totalorder %s17, 0
    %p127 = por %p125, %p126
    %s128 = ssub.s32 %s19, %s33
    %p129 = scmp.eq.s32.totalorder %s128, 0
    %s131 = sadd.s32 %s130, 1
    %s132 = scalar_select %p129, %s130, %s131
    %p135 = pneg %p129
    %p136 = scmp.eq.s32.totalorder %s11, 3
    %p137 = por %p135, %p136
    %p138 = scmp.ne.s32.totalorder %s130, %s133
    %p139 = scmp.eq.s32.totalorder %s11, 0
    %p140 = por %p138, %p139
    %p141 = scmp.ne.s32.totalorder %s130, %s133
    %p142 = scmp.eq.s32.totalorder %s16, 3
    %p143 = por %p141, %p142
    %p144 = scmp.ne.s32.totalorder %s133, %s134
    %p145 = scmp.eq.s32.totalorder %s16, 0
    %p146 = por %p144, %p145
    %p147 = scmp.ne.s32.totalorder %s133, %s134
    %p148 = scmp.eq.s32.totalorder %s17, 3
    %p149 = por %p147, %p148
    %p151 = scmp.ne.s32.totalorder %s134, %s150
    %p152 = scmp.eq.s32.totalorder %s17, 0
    %p153 = por %p151, %p152
    %s154 = ssub.s32 %s19, %s33
    %p155 = scmp.eq.s32.totalorder %s154, 0
    %s157 = sadd.s32 %s156, 1
    %s158 = scalar_select %p155, %s156, %s157
    %p161 = pneg %p155
    %p162 = scmp.eq.s32.totalorder %s11, 3
    %p163 = por %p161, %p162
    %p164 = scmp.ne.s32.totalorder %s156, %s159
    %p165 = scmp.eq.s32.totalorder %s11, 0
    %p166 = por %p164, %p165
    %p167 = scmp.ne.s32.totalorder %s156, %s159
    %p168 = scmp.eq.s32.totalorder %s16, 3
    %p169 = por %p167, %p168
    %p170 = scmp.ne.s32.totalorder %s159, %s160
    %p171 = scmp.eq.s32.totalorder %s16, 0
    %p172 = por %p170, %p171
    %p173 = scmp.ne.s32.totalorder %s159, %s160
    %p174 = scmp.eq.s32.totalorder %s17, 3
    %p175 = por %p173, %p174
    %p177 = scmp.ne.s32.totalorder %s160, %s176
    %p178 = scmp.eq.s32.totalorder %s17, 0
    %p179 = por %p177, %p178
    %s180 = ssub.s32 %s20, 1
    %p181 = scmp.gt.s32.totalorder %s180, 0
    %s182 = scalar_select %p181, %s180, 0
    %s183 = ssub.s32 %s29, 1
    %p184 = scmp.gt.s32.totalorder %s183, 0
    %s185 = scalar_select %p184, %s183, 0
    %s186 = ssub.s32 %s18, %s37
    %s187 = ssub.s32 %s19, %s33
    %s188 = sor.u32 %s186, %s187
    %s189 = ssub.s32 %s182, %s185
    %s190 = sor.u32 %s188, %s189
    %p191 = scmp.eq.s32.totalorder %s190, 0
    %s193 = sadd.s32 %s192, 1
    %s194 = scalar_select %p191, %s192, %s193
    %p197 = pneg %p191
    %p198 = scmp.eq.s32.totalorder %s11, 3
    %p199 = por %p197, %p198
    %p200 = scmp.ne.s32.totalorder %s192, %s195
    %p201 = scmp.eq.s32.totalorder %s11, 0
    %p202 = por %p200, %p201
    %p203 = scmp.ne.s32.totalorder %s192, %s195
    %p204 = scmp.eq.s32.totalorder %s16, 3
    %p205 = por %p203, %p204
    %p206 = scmp.ne.s32.totalorder %s195, %s196
    %p207 = scmp.eq.s32.totalorder %s16, 0
    %p208 = por %p206, %p207
    %p209 = scmp.ne.s32.totalorder %s195, %s196
    %p210 = scmp.eq.s32.totalorder %s17, 3
    %p211 = por %p209, %p210
    %p213 = scmp.ne.s32.totalorder %s196, %s212
    %p214 = scmp.eq.s32.totalorder %s17, 0
    %p215 = por %p213, %p214
    %p216 = scmp.le.s32.totalorder 1, %s11
    %p217 = scmp.lt.s32.totalorder %s11, 5
    %p218 = pnand %p216, %p217
    %p219 = pneg %p218
    // Predicated region
    $region9: #{bafm_cff_pallas.1} parent=5 // pred_check
      _
    $region10: #{bafm_cff_pallas.1} parent=5 // pred_check_branch
      %221 = sbr.rel (%p218) target = $region12
    $region11: #{bafm_cff_pallas.1} parent=5 // pred_region
      %s222 = ssub.s32 %s11, 1
      // Predicated region
      $region13: #{bafm_cff_pallas.1} parent=11 // pred_check
        %p223 = pneg %p120
      $region14: #{bafm_cff_pallas.1} parent=11 // pred_check_branch
        %225 = sbr.rel (%p223) target = $region16
      $region15: #{bafm_cff_pallas.1} parent=11 // pred_region
        %s226 = smul.u32 16, %s22
        %p227 = scmp.lt.s32.totalorder %s226, 15
        %s228 = scalar_select %p227, %s226, 15
        %s229 = smul.addr %s228, 8
        %s230 = scalar_lea.vmem %s2, %s229
        %s231 = smul.u32 16, %s22
      $region16: #{bafm_cff_pallas.1} parent=11 // pred_fallthru
        _
      // Predicated region
      $region17: #{bafm_cff_pallas.1} parent=11 // pred_check
        %p232 = pneg %p146
      $region18: #{bafm_cff_pallas.1} parent=11 // pred_check_branch
        %234 = sbr.rel (%p232) target = $region20
      $region19: #{bafm_cff_pallas.1} parent=11 // pred_region
        %s235 = smul.u32 16, %s22
        %p236 = scmp.lt.s32.totalorder %s235, 15
        %s237 = scalar_select %p236, %s235, 15
        %s238 = smul.addr %s237, 8
        %s239 = scalar_lea.vmem %s3, %s238
        %s240 = smul.u32 16, %s22
      $region20: #{bafm_cff_pallas.1} parent=11 // pred_fallthru
        _
      // Predicated region
      $region21: #{bafm_cff_pallas.1} parent=11 // pred_check
        %p241 = pneg %p172
      $region22: #{bafm_cff_pallas.1} parent=11 // pred_check_branch
        %243 = sbr.rel (%p241) target = $region24
      $region23: #{bafm_cff_pallas.1} parent=11 // pred_region
        %s244 = smul.u32 16, %s22
        %p245 = scmp.lt.s32.totalorder %s244, 15
        %s246 = scalar_select %p245, %s244, 15
        %s247 = smul.addr %s246, 8
        %s248 = scalar_lea.vmem %s4, %s247
        %s249 = smul.u32 16, %s22
      $region24: #{bafm_cff_pallas.1} parent=11 // pred_fallthru
        _
    $region12: #{bafm_cff_pallas.1} parent=5 // pred_fallthru
      _
    %p250 = scmp.lt.s32.totalorder %s11, 4
    // Predicated region
    $region25: #{bafm_cff_pallas.1} parent=5 // pred_check
      %p251 = pneg %p250
    $region26: #{bafm_cff_pallas.1} parent=5 // pred_check_branch
      %253 = sbr.rel (%p251) target = $region28
    $region27: #{bafm_cff_pallas.1} parent=5 // pred_region
      // Predicated region
      $region29: #{bafm_cff_pallas.1} parent=27 // pred_check
        %p254 = pneg %p56
      $region30: #{bafm_cff_pallas.1} parent=27 // pred_check_branch
        %256 = sbr.rel (%p254) target = $region32
      $region31: #{bafm_cff_pallas.1} parent=27 // pred_region
        %p257 = scmp.lt.s32.totalorder %s20, 0
        %s258 = scalar_select %p257, %s20, 0
        %s259 = smul.u32 2, %s258
        %p260 = scmp.lt.s32.totalorder %s18, 1
        %s261 = scalar_select %p260, %s18, 1
        %p262 = scmp.lt.s32.totalorder %s259, 1
        %s263 = scalar_select %p262, %s259, 1
        %s264 = smul.addr %s261, 32
        %s265 = sadd.s32 %s263, %s264
        %s266 = smul.addr %s265, 8
        %s267 = scalar_lea.vmem %s0, %s266
        %p268 = scmp.lt.s32.totalorder %s20, 0
        %s269 = scalar_select %p268, %s20, 0
        %s270 = smul.u32 2, %s269
      $region32: #{bafm_cff_pallas.1} parent=27 // pred_fallthru
        _
      // Predicated region
      $region33: #{bafm_cff_pallas.1} parent=27 // pred_check
        %p271 = pneg %p88
      $region34: #{bafm_cff_pallas.1} parent=27 // pred_check_branch
        %273 = sbr.rel (%p271) target = $region36
      $region35: #{bafm_cff_pallas.1} parent=27 // pred_region
        %p274 = scmp.lt.s32.totalorder %s20, 0
        %s275 = scalar_select %p274, %s20, 0
        %s276 = smul.u32 2, %s275
        %p277 = scmp.lt.s32.totalorder %s18, 1
        %s278 = scalar_select %p277, %s18, 1
        %p279 = scmp.lt.s32.totalorder %s276, 1
        %s280 = scalar_select %p279, %s276, 1
        %s281 = smul.addr %s278, 16
        %s282 = sadd.s32 %s280, %s281
        %s283 = smul.addr %s282, 8
        %s284 = scalar_lea.vmem %s1, %s283
        %p285 = scmp.lt.s32.totalorder %s20, 0
        %s286 = scalar_select %p285, %s20, 0
        %s287 = smul.u32 2, %s286
      $region36: #{bafm_cff_pallas.1} parent=27 // pred_fallthru
        _
    $region28: #{bafm_cff_pallas.1} parent=5 // pred_fallthru
      _
    %p288 = scmp.le.s32.totalorder 1, %s11
    %p289 = scmp.lt.s32.totalorder %s11, 5
    %p290 = pnand %p288, %p289
    %p291 = pneg %p290
    // Predicated region
    $region37: #{bafm_cff_pallas.1} parent=5 // pred_check
      _
    $region38: #{bafm_cff_pallas.1} parent=5 // pred_check_branch
      %293 = sbr.rel (%p290) target = $region40
    $region39: #{bafm_cff_pallas.1} parent=5 // pred_region
      %s294 = ssub.s32 %s11, 1
      %p295 = scmp.lt.s32.totalorder %s23, 0
      %s296 = scalar_select %p295, %s23, 0
      %s297 = smul.u32 2, %s296
      %p298 = scmp.lt.s32.totalorder %s21, 1
      %s299 = scalar_select %p298, %s21, 1
      %p300 = scmp.lt.s32.totalorder %s297, 1
      %s301 = scalar_select %p300, %s297, 1
      %s302 = smul.addr %s299, 32
      %s303 = sadd.s32 %s301, %s302
      %s304 = smul.addr %s303, 8
      %s305 = scalar_lea.vmem %s0, %s304
      %p306 = pneg %p62
      %p307 = pneg %p59
      %p308 = scmp.lt.s32.totalorder %s23, 0
      %s309 = scalar_select %p308, %s23, 0
      %s310 = smul.u32 2, %s309
      %p311 = scmp.lt.s32.totalorder %s21, 1
      %s312 = scalar_select %p311, %s21, 1
      %p313 = scmp.lt.s32.totalorder %s310, 1
      %s314 = scalar_select %p313, %s310, 1
      %s315 = smul.addr %s312, 16
      %s316 = sadd.s32 %s314, %s315
      %s317 = smul.addr %s316, 8
      %s318 = scalar_lea.vmem %s1, %s317
      %p319 = pneg %p94
      %p320 = pneg %p91
      %s321 = smul.u32 16, %s22
      %p322 = scmp.lt.s32.totalorder %s321, 15
      %s323 = scalar_select %p322, %s321, 15
      %s324 = smul.addr %s323, 8
      %s325 = scalar_lea.vmem %s2, %s324
      %p326 = pneg %p120
      %p327 = pneg %p117
      %s328 = smul.u32 16, %s22
      %p329 = scmp.lt.s32.totalorder %s328, 15
      %s330 = scalar_select %p329, %s328, 15
      %s331 = smul.addr %s330, 8
      %s332 = scalar_lea.vmem %s3, %s331
      %p333 = pneg %p146
      %p334 = pneg %p143
      %s335 = smul.u32 16, %s22
      %p336 = scmp.lt.s32.totalorder %s335, 15
      %s337 = scalar_select %p336, %s335, 15
      %s338 = smul.addr %s337, 8
      %s339 = scalar_lea.vmem %s4, %s338
      %p340 = pneg %p172
      %p341 = pneg %p169
      %p342 = pneg %p208
      %p343 = pneg %p205
      %s344 = ssub.s32 %s23, 1
      %p345 = scmp.gt.s32.totalorder %s344, 0
      %s346 = scalar_select %p345, %s344, 0
      %s347 = smul.u32 16, %s22
      %s348 = smul.u32 2, %s346
      %p349 = scmp.lt.s32.totalorder %s21, 1
      %s350 = scalar_select %p349, %s21, 1
      %p351 = scmp.lt.s32.totalorder %s347, 15
      %s352 = scalar_select %p351, %s347, 15
      %p353 = scmp.lt.s32.totalorder %s348, 1
      %s354 = scalar_select %p353, %s348, 1
      %s355 = smul.addr %s352, 2
      %s356 = sadd.s32 %s354, %s355
      %s357 = smul.addr %s350, 32
      %s358 = sadd.s32 %s356, %s357
      %s359 = smul.addr %s358, 8
      %s360 = scalar_lea.vmem %s5, %s359
      %p361 = scmp.lt.s32.totalorder %s23, 0
      %s362 = scalar_select %p361, %s23, 0
      %s363 = smul.u32 2, %s362
      %p364 = scmp.lt.s32.totalorder %s21, 1
      %s365 = scalar_select %p364, %s21, 1
      %p366 = scmp.lt.s32.totalorder %s363, 1
      %s367 = scalar_select %p366, %s363, 1
      %s368 = smul.addr %s365, 32
      %s369 = sadd.s32 %s367, %s368
      %s370 = smul.addr %s369, 8
      %s371 = scalar_lea.vmem %s0, %s370
      %p372 = scmp.lt.s32.totalorder %s23, 0
      %s373 = scalar_select %p372, %s23, 0
      %s374 = smul.u32 2, %s373
      %p375 = scmp.lt.s32.totalorder %s23, 0
      %s376 = scalar_select %p375, %s23, 0
      %s377 = smul.u32 2, %s376
      %p378 = scmp.lt.s32.totalorder %s21, 1
      %s379 = scalar_select %p378, %s21, 1
      %p380 = scmp.lt.s32.totalorder %s377, 1
      %s381 = scalar_select %p380, %s377, 1
      %s382 = smul.addr %s379, 16
      %s383 = sadd.s32 %s381, %s382
      %s384 = smul.addr %s383, 8
      %s385 = scalar_lea.vmem %s1, %s384
      %p386 = scmp.lt.s32.totalorder %s23, 0
      %s387 = scalar_select %p386, %s23, 0
      %s388 = smul.u32 2, %s387
      %s389 = smul.u32 16, %s22
      %p390 = scmp.lt.s32.totalorder %s389, 15
      %s391 = scalar_select %p390, %s389, 15
      %s392 = smul.addr %s391, 8
      %s393 = scalar_lea.vmem %s2, %s392
      %s394 = smul.u32 16, %s22
      %s395 = smul.u32 16, %s22
      %p396 = scmp.lt.s32.totalorder %s395, 15
      %s397 = scalar_select %p396, %s395, 15
      %s398 = smul.addr %s397, 8
      %s399 = scalar_lea.vmem %s3, %s398
      %s400 = smul.u32 16, %s22
      %s401 = smul.u32 16, %s22
      %p402 = scmp.lt.s32.totalorder %s401, 15
      %s403 = scalar_select %p402, %s401, 15
      %s404 = smul.addr %s403, 8
      %s405 = scalar_lea.vmem %s4, %s404
      %s406 = smul.u32 16, %s22
      %s407 = ssub.s32 %s23, 1
      %p408 = scmp.gt.s32.totalorder %s407, 0
      %s409 = scalar_select %p408, %s407, 0
      %s410 = smul.u32 16, %s22
      %s411 = smul.u32 2, %s409
      %p412 = scmp.lt.s32.totalorder %s21, 1
      %s413 = scalar_select %p412, %s21, 1
      %p414 = scmp.lt.s32.totalorder %s410, 15
      %s415 = scalar_select %p414, %s410, 15
      %p416 = scmp.lt.s32.totalorder %s411, 1
      %s417 = scalar_select %p416, %s411, 1
      %s418 = smul.addr %s415, 2
      %s419 = sadd.s32 %s417, %s418
      %s420 = smul.addr %s413, 32
      %s421 = sadd.s32 %s419, %s420
      %s422 = smul.addr %s421, 8
      %s423 = scalar_lea.vmem %s5, %s422
      %s424 = ssub.s32 %s23, 1
      %p425 = scmp.gt.s32.totalorder %s424, 0
      %s426 = scalar_select %p425, %s424, 0
      %s427 = smul.u32 16, %s22
      %s428 = smul.u32 2, %s426
      %p429 = scmp.eq.s32.totalorder %s23, 0
      // Predicated region
      $region41: #{bafm_cff_pallas.1} parent=39 // pred_check
        %p430 = pneg %p429
      $region42: #{bafm_cff_pallas.1} parent=39 // pred_check_branch
        %432 = sbr.rel (%p430) target = $region44
      $region43: #{bafm_cff_pallas.1} parent=39 // pred_region
        %vm433 = vcmask 7168
        %434 = vst.msk [vmem:[#allocation3] sm:$0xff] %vm433, 0.0
        %435 = vst.msk [vmem:[#allocation3 + $0x8] sm:$0xff] %vm433, 0.0
        %436 = vst.msk [vmem:[#allocation3 + $0x10] sm:$0xff] %vm433, 0.0
        %437 = vst.msk [vmem:[#allocation3 + $0x18] sm:$0xff] %vm433, 0.0
        %438 = vst.msk [vmem:[#allocation3 + $0x20] sm:$0xff] %vm433, 0.0
        %439 = vst.msk [vmem:[#allocation3 + $0x28] sm:$0xff] %vm433, 0.0
        %440 = vst.msk [vmem:[#allocation3 + $0x30] sm:$0xff] %vm433, 0.0
        %441 = vst.msk [vmem:[#allocation3 + $0x38] sm:$0xff] %vm433, 0.0
        %442 = vst.msk [vmem:[#allocation3 + $0x40] sm:$0xff] %vm433, 0.0
        %443 = vst.msk [vmem:[#allocation3 + $0x48] sm:$0xff] %vm433, 0.0
        %444 = vst.msk [vmem:[#allocation3 + $0x50] sm:$0xff] %vm433, 0.0
        %445 = vst.msk [vmem:[#allocation3 + $0x58] sm:$0xff] %vm433, 0.0
        %446 = vst.msk [vmem:[#allocation3 + $0x60] sm:$0xff] %vm433, 0.0
        %447 = vst.msk [vmem:[#allocation3 + $0x68] sm:$0xff] %vm433, 0.0
        %448 = vst.msk [vmem:[#allocation3 + $0x70] sm:$0xff] %vm433, 0.0
        %449 = vst.msk [vmem:[#allocation3 + $0x78] sm:$0xff] %vm433, 0.0
      $region44: #{bafm_cff_pallas.1} parent=39 // pred_fallthru
        _
      %p450 = scmp.lt.s32.totalorder %s23, 1
      // Predicated region
      $region45: #{bafm_cff_pallas.1} parent=39 // pred_check
        %p451 = pneg %p450
      $region46: #{bafm_cff_pallas.1} parent=39 // pred_check_branch
        %453 = sbr.rel (%p451) target = $region48
      $region47: #{bafm_cff_pallas.1} parent=39 // pred_region
        %v454 = vld [vmem:[%s371] sm:$0xff]
        %v455 = vld [vmem:[%s371 + $0x8] sm:$0xff]
        %v456 = vld [vmem:[%s371 + $0x10] sm:$0xff]
        %v457 = vld [vmem:[%s371 + $0x18] sm:$0xff]
        %v458 = vld [vmem:[%s371 + $0x20] sm:$0xff]
        %v459 = vld [vmem:[%s371 + $0x28] sm:$0xff]
        %v460 = vld [vmem:[%s371 + $0x30] sm:$0xff]
        %v461 = vld [vmem:[%s371 + $0x38] sm:$0xff]
        %v462 = vld [vmem:[%s371 + $0x40] sm:$0xff]
        %v463 = vld [vmem:[%s371 + $0x48] sm:$0xff]
        %v464 = vld [vmem:[%s371 + $0x50] sm:$0xff]
        %v465 = vld [vmem:[%s371 + $0x58] sm:$0xff]
        %v466 = vld [vmem:[%s371 + $0x60] sm:$0xff]
        %v467 = vld [vmem:[%s371 + $0x68] sm:$0xff]
        %v468 = vld [vmem:[%s371 + $0x70] sm:$0xff]
        %v469 = vld [vmem:[%s371 + $0x78] sm:$0xff]
        %v470 = vld [vmem:[%s371 + $0x80] sm:$0xff]
        %v471 = vld [vmem:[%s371 + $0x88] sm:$0xff]
        %v472 = vld [vmem:[%s371 + $0x90] sm:$0xff]
        %v473 = vld [vmem:[%s371 + $0x98] sm:$0xff]
        %v474 = vld [vmem:[%s371 + $0xa0] sm:$0xff]
        %v475 = vld [vmem:[%s371 + $0xa8] sm:$0xff]
        %v476 = vld [vmem:[%s371 + $0xb0] sm:$0xff]
        %v477 = vld [vmem:[%s371 + $0xb8] sm:$0xff]
        %v478 = vld [vmem:[%s371 + $0xc0] sm:$0xff]
        %v479 = vld [vmem:[%s371 + $0xc8] sm:$0xff]
        %v480 = vld [vmem:[%s371 + $0xd0] sm:$0xff]
        %v481 = vld [vmem:[%s371 + $0xd8] sm:$0xff]
        %v482 = vld [vmem:[%s371 + $0xe0] sm:$0xff]
        %v483 = vld [vmem:[%s371 + $0xe8] sm:$0xff]
        %v484 = vld [vmem:[%s371 + $0xf0] sm:$0xff]
        %v485 = vld [vmem:[%s371 + $0xf8] sm:$0xff]
        %v486 = vld [vmem:[%s385] sm:$0xff]
        %v487 = vld [vmem:[%s385 + $0x8] sm:$0xff]
        %v488 = vld [vmem:[%s385 + $0x10] sm:$0xff]
        %v489 = vld [vmem:[%s385 + $0x18] sm:$0xff]
        %v490 = vld [vmem:[%s385 + $0x20] sm:$0xff]
        %v491 = vld [vmem:[%s385 + $0x28] sm:$0xff]
        %v492 = vld [vmem:[%s385 + $0x30] sm:$0xff]
        %v493 = vld [vmem:[%s385 + $0x38] sm:$0xff]
        %v494 = vld [vmem:[%s385 + $0x40] sm:$0xff]
        %v495 = vld [vmem:[%s385 + $0x48] sm:$0xff]
        %v496 = vld [vmem:[%s385 + $0x50] sm:$0xff]
        %v497 = vld [vmem:[%s385 + $0x58] sm:$0xff]
        %v498 = vld [vmem:[%s385 + $0x60] sm:$0xff]
        %v499 = vld [vmem:[%s385 + $0x68] sm:$0xff]
        %v500 = vld [vmem:[%s385 + $0x70] sm:$0xff]
        %v501 = vld [vmem:[%s385 + $0x78] sm:$0xff]
        %v502 = vld [vmem:[%s393] sm:$0xff]
        %v503 = vld [vmem:[%s393 + $0x8] sm:$0xff]
        %v504 = vld [vmem:[%s393 + $0x10] sm:$0xff]
        %v505 = vld [vmem:[%s393 + $0x18] sm:$0xff]
        %v506 = vld [vmem:[%s393 + $0x20] sm:$0xff]
        %v507 = vld [vmem:[%s393 + $0x28] sm:$0xff]
        %v508 = vld [vmem:[%s393 + $0x30] sm:$0xff]
        %v509 = vld [vmem:[%s393 + $0x38] sm:$0xff]
        %v510 = vld [vmem:[%s393 + $0x40] sm:$0xff]
        %v511 = vld [vmem:[%s393 + $0x48] sm:$0xff]
        %v512 = vld [vmem:[%s393 + $0x50] sm:$0xff]
        %v513 = vld [vmem:[%s393 + $0x58] sm:$0xff]
        %v514 = vld [vmem:[%s393 + $0x60] sm:$0xff]
        %v515 = vld [vmem:[%s393 + $0x68] sm:$0xff]
        %v516 = vld [vmem:[%s393 + $0x70] sm:$0xff]
        %v517 = vld [vmem:[%s393 + $0x78] sm:$0xff]
        %v518 = vld [vmem:[%s399] sm:$0xff]
        %v519 = vld [vmem:[%s399 + $0x8] sm:$0xff]
        %v520 = vld [vmem:[%s399 + $0x10] sm:$0xff]
        %v521 = vld [vmem:[%s399 + $0x18] sm:$0xff]
        %v522 = vld [vmem:[%s399 + $0x20] sm:$0xff]
        %v523 = vld [vmem:[%s399 + $0x28] sm:$0xff]
        %v524 = vld [vmem:[%s399 + $0x30] sm:$0xff]
        %v525 = vld [vmem:[%s399 + $0x38] sm:$0xff]
        %v526 = vld [vmem:[%s399 + $0x40] sm:$0xff]
        %v527 = vld [vmem:[%s399 + $0x48] sm:$0xff]
        %v528 = vld [vmem:[%s399 + $0x50] sm:$0xff]
        %v529 = vld [vmem:[%s399 + $0x58] sm:$0xff]
        %v530 = vld [vmem:[%s399 + $0x60] sm:$0xff]
        %v531 = vld [vmem:[%s399 + $0x68] sm:$0xff]
        %v532 = vld [vmem:[%s399 + $0x70] sm:$0xff]
        %v533 = vld [vmem:[%s399 + $0x78] sm:$0xff]
        %vm534 = vcmask 523264
        %v536 = vsel %vm534, %v518, 0
        %v539 = vsel %vm534, %v519, 0
        %v542 = vsel %vm534, %v520, 0
        %v545 = vsel %vm534, %v521, 0
        %v548 = vsel %vm534, %v522, 0
        %v551 = vsel %vm534, %v523, 0
        %v554 = vsel %vm534, %v524, 0
        %v557 = vsel %vm534, %v525, 0
        %v560 = vsel %vm534, %v526, 0
        %v563 = vsel %vm534, %v527, 0
        %v566 = vsel %vm534, %v528, 0
        %v569 = vsel %vm534, %v529, 0
        %v572 = vsel %vm534, %v530, 0
        %v575 = vsel %vm534, %v531, 0
        %v578 = vsel %vm534, %v532, 0
        %v581 = vsel %vm534, %v533, 0
        %583 = vmatprep.subr.mxu0 %v487
        %584 = vmatpush1.msra.mxu0 %v486
        %585 = vmatprep.subr.mxu0 %v489
        %586 = vmatpush1.msra.mxu0 %v488
        %587 = vmatprep.subr.mxu0 %v491
        %588 = vmatpush1.msra.mxu0 %v490
        %589 = vmatprep.subr.mxu0 %v493
        %590 = vmatpush1.msra.mxu0 %v492
        %591 = vmatprep.subr.mxu0 %v495
        %592 = vmatpush1.msra.mxu0 %v494
        %593 = vmatprep.subr.mxu0 %v497
        %594 = vmatpush1.msra.mxu0 %v496
        %595 = vmatprep.subr.mxu0 %v499
        %596 = vmatpush1.msra.mxu0 %v498
        %597 = vmatprep.subr.mxu0 %v501
        %598 = vmatpush1.msra.mxu0 %v500
        %599 = vmatprep.subr.mxu0 0.0
        %600 = vmatpush1.msra.mxu0 0.0
        %601 = vmatprep.subr.mxu0 0.0
        %602 = vmatpush1.msra.mxu0 0.0
        %603 = vmatprep.subr.mxu0 0.0
        %604 = vmatpush1.msra.mxu0 0.0
        %605 = vmatprep.subr.mxu0 0.0
        %606 = vmatpush1.msra.mxu0 0.0
        %607 = vmatprep.subr.mxu0 0.0
        %608 = vmatpush1.msra.mxu0 0.0
        %609 = vmatprep.subr.mxu0 0.0
        %610 = vmatpush1.msra.mxu0 0.0
        %611 = vmatprep.subr.mxu0 0.0
        %612 = vmatpush1.msra.mxu0 0.0
        %613 = vmatprep.subr.mxu0 0.0
        %614 = vmatpush1.msra.mxu0 0.0
        %615 = vmatprep.subr.mxu0 0.0
        %616 = vmatpush1.msra.mxu0 0.0
        %617 = vmatprep.subr.mxu0 0.0
        %618 = vmatpush1.msra.mxu0 0.0
        %619 = vmatprep.subr.mxu0 0.0
        %620 = vmatpush1.msra.mxu0 0.0
        %621 = vmatprep.subr.mxu0 0.0
        %622 = vmatpush1.msra.mxu0 0.0
        %623 = vmatprep.subr.mxu0 0.0
        %624 = vmatpush1.msra.mxu0 0.0
        %625 = vmatprep.subr.mxu0 0.0
        %626 = vmatpush1.msra.mxu0 0.0
        %627 = vmatprep.subr.mxu0 0.0
        %628 = vmatpush1.msra.mxu0 0.0
        %629 = vmatprep.subr.mxu0 0.0
        %630 = vmatpush1.msra.mxu0 0.0
        %631 = vmatprep.subr.mxu0 0.0
        %632 = vmatpush1.msra.mxu0 0.0
        %633 = vmatprep.subr.mxu0 0.0
        %634 = vmatpush1.msra.mxu0 0.0
        %635 = vmatprep.subr.mxu0 0.0
        %636 = vmatpush1.msra.mxu0 0.0
        %637 = vmatprep.subr.mxu0 0.0
        %638 = vmatpush1.msra.mxu0 0.0
        %639 = vmatprep.subr.mxu0 0.0
        %640 = vmatpush1.msra.mxu0 0.0
        %641 = vmatprep.subr.mxu0 0.0
        %642 = vmatpush1.msra.mxu0 0.0
        %643 = vmatprep.subr.mxu0 0.0
        %644 = vmatpush1.msra.mxu0 0.0
        %645 = vmatprep.subr.mxu0 0.0
        %646 = vmatpush1.msra.mxu0 0.0
        %647 = vmatprep.mubr.f32.mxu0 0.0
        %648 = vmatmul.mubr.f32.gmra.mrb[0].mxu0 %v536
        %v649 = vpop.f32.mrb[0].mxu0
        %v650 = vadd.f32 0.0, %v649
        %v651 = vpop.f32.mrb[0].mxu0
        %v652 = vadd.f32 0.0, %v651
        %653 = vmatprep.mubr.f32.mxu0 0.0
        %654 = vmatmul.mubr.f32.gmra.mrb[0].mxu0 %v539
        %v655 = vpop.f32.mrb[0].mxu0
        %v656 = vadd.f32 0.0, %v655
        %v657 = vpop.f32.mrb[0].mxu0
        %v658 = vadd.f32 0.0, %v657
        %659 = vmatprep.mubr.f32.mxu0 0.0
        %660 = vmatmul.mubr.f32.gmra.mrb[0].mxu0 %v542
        %v661 = vpop.f32.mrb[0].mxu0
        %v662 = vadd.f32 0.0, %v661
        %v663 = vpop.f32.mrb[0].mxu0
        %v664 = vadd.f32 0.0, %v663
        %665 = vmatprep.mubr.f32.mxu0 0.0
        %666 = vmatmul.mubr.f32.gmra.mrb[0].mxu0 %v545
        %v667 = vpop.f32.mrb[0].mxu0
        %v668 = vadd.f32 0.0, %v667
        %v669 = vpop.f32.mrb[0].mxu0
        %v670 = vadd.f32 0.0, %v669
        %671 = vmatprep.mubr.f32.mxu0 0.0
        %672 = vmatmul.mubr.f32.gmra.mrb[0].mxu0 %v548
        %v673 = vpop.f32.mrb[0].mxu0
        %v674 = vadd.f32 0.0, %v673
        %v675 = vpop.f32.mrb[0].mxu0
        %v676 = vadd.f32 0.0, %v675
        %677 = vmatprep.mubr.f32.mxu0 0.0
        %678 = vmatmul.mubr.f32.gmra.mrb[0].mxu0 %v551
        %v679 = vpop.f32.mrb[0].mxu0
        %v680 = vadd.f32 0.0, %v679
        %v681 = vpop.f32.mrb[0].mxu0
        %v682 = vadd.f32 0.0, %v681
        %683 = vmatprep.mubr.f32.mxu0 0.0
        %684 = vmatmul.mubr.f32.gmra.mrb[0].mxu0 %v554
        %v685 = vpop.f32.mrb[0].mxu0
        %v686 = vadd.f32 0.0, %v685
        %v687 = vpop.f32.mrb[0].mxu0
        %v688 = vadd.f32 0.0, %v687
        %689 = vmatprep.mubr.f32.mxu0 0.0
        %690 = vmatmul.mubr.f32.gmra.mrb[0].mxu0 %v557
        %v691 = vpop.f32.mrb[0].mxu0
        %v692 = vadd.f32 0.0, %v691
        %v693 = vpop.f32.mrb[0].mxu0
        %v694 = vadd.f32 0.0, %v693
        %695 = vmatprep.mubr.f32.mxu0 0.0
        %696 = vmatmul.mubr.f32.gmra.mrb[0].mxu0 %v560
        %v697 = vpop.f32.mrb[0].mxu0
        %v698 = vadd.f32 0.0, %v697
        %v699 = vpop.f32.mrb[0].mxu0
        %v700 = vadd.f32 0.0, %v699
        %701 = vmatprep.mubr.f32.mxu0 0.0
        %702 = vmatmul.mubr.f32.gmra.mrb[0].mxu0 %v563
        %v703 = vpop.f32.mrb[0].mxu0
        %v704 = vadd.f32 0.0, %v703
        %v705 = vpop.f32.mrb[0].mxu0
        %v706 = vadd.f32 0.0, %v705
        %707 = vmatprep.mubr.f32.mxu0 0.0
        %708 = vmatmul.mubr.f32.gmra.mrb[0].mxu0 %v566
        %v709 = vpop.f32.mrb[0].mxu0
        %v710 = vadd.f32 0.0, %v709
        %v711 = vpop.f32.mrb[0].mxu0
        %v712 = vadd.f32 0.0, %v711
        %713 = vmatprep.mubr.f32.mxu0 0.0
        %714 = vmatmul.mubr.f32.gmra.mrb[0].mxu0 %v569
        %v715 = vpop.f32.mrb[0].mxu0
        %v716 = vadd.f32 0.0, %v715
        %v717 = vpop.f32.mrb[0].mxu0
        %v718 = vadd.f32 0.0, %v717
        %719 = vmatprep.mubr.f32.mxu0 0.0
        %720 = vmatmul.mubr.f32.gmra.mrb[0].mxu0 %v572
        %v721 = vpop.f32.mrb[0].mxu0
        %v722 = vadd.f32 0.0, %v721
        %v723 = vpop.f32.mrb[0].mxu0
        %v724 = vadd.f32 0.0, %v723
        %725 = vmatprep.mubr.f32.mxu0 0.0
        %726 = vmatmul.mubr.f32.gmra.mrb[0].mxu0 %v575
        %v727 = vpop.f32.mrb[0].mxu0
        %v728 = vadd.f32 0.0, %v727
        %v729 = vpop.f32.mrb[0].mxu0
        %v730 = vadd.f32 0.0, %v729
        %731 = vmatprep.mubr.f32.mxu0 0.0
        %732 = vmatmul.mubr.f32.gmra.mrb[0].mxu0 %v578
        %v733 = vpop.f32.mrb[0].mxu0
        %v734 = vadd.f32 0.0, %v733
        %v735 = vpop.f32.mrb[0].mxu0
        %v736 = vadd.f32 0.0, %v735
        %737 = vmatprep.mubr.f32.mxu0 0.0
        %738 = vmatmul.mubr.f32.gmra.mrb[0].mxu0 %v581
        %v739 = vpop.f32.mrb[0].mxu0
        %v740 = vadd.f32 0.0, %v739
        %v741 = vpop.f32.mrb[0].mxu0
        %v742 = vadd.f32 0.0, %v741
        %743 = vdwg.mxu0
        %744 = vmatprep.subr.mxu0 %v455
        %745 = vmatpush1.msra.mxu0 %v454
        %746 = vmatprep.subr.mxu0 %v457
        %747 = vmatpush1.msra.mxu0 %v456
        %748 = vmatprep.subr.mxu0 %v459
        %749 = vmatpush1.msra.mxu0 %v458
        %750 = vmatprep.subr.mxu0 %v461
        %751 = vmatpush1.msra.mxu0 %v460
        %752 = vmatprep.subr.mxu0 %v463
        %753 = vmatpush1.msra.mxu0 %v462
        %754 = vmatprep.subr.mxu0 %v465
        %755 = vmatpush1.msra.mxu0 %v464
        %756 = vmatprep.subr.mxu0 %v467
        %757 = vmatpush1.msra.mxu0 %v466
        %758 = vmatprep.subr.mxu0 %v469
        %759 = vmatpush1.msra.mxu0 %v468
        %760 = vmatprep.subr.mxu0 %v471
        %761 = vmatpush1.msra.mxu0 %v470
        %762 = vmatprep.subr.mxu0 %v473
        %763 = vmatpush1.msra.mxu0 %v472
        %764 = vmatprep.subr.mxu0 %v475
        %765 = vmatpush1.msra.mxu0 %v474
        %766 = vmatprep.subr.mxu0 %v477
        %767 = vmatpush1.msra.mxu0 %v476
        %768 = vmatprep.subr.mxu0 %v479
        %769 = vmatpush1.msra.mxu0 %v478
        %770 = vmatprep.subr.mxu0 %v481
        %771 = vmatpush1.msra.mxu0 %v480
        %772 = vmatprep.subr.mxu0 %v483
        %773 = vmatpush1.msra.mxu0 %v482
        %774 = vmatprep.subr.mxu0 %v485
        %775 = vmatpush1.msra.mxu0 %v484
        %776 = vmatprep.subr.mxu0 0.0
        %777 = vmatpush1.msra.mxu0 0.0
        %778 = vmatprep.subr.mxu0 0.0
        %779 = vmatpush1.msra.mxu0 0.0
        %780 = vmatprep.subr.mxu0 0.0
        %781 = vmatpush1.msra.mxu0 0.0
        %782 = vmatprep.subr.mxu0 0.0
        %783 = vmatpush1.msra.mxu0 0.0
        %784 = vmatprep.subr.mxu0 0.0
        %785 = vmatpush1.msra.mxu0 0.0
        %786 = vmatprep.subr.mxu0 0.0
        %787 = vmatpush1.msra.mxu0 0.0
        %788 = vmatprep.subr.mxu0 0.0
        %789 = vmatpush1.msra.mxu0 0.0
        %790 = vmatprep.subr.mxu0 0.0
        %791 = vmatpush1.msra.mxu0 0.0
        %792 = vmatprep.subr.mxu0 0.0
        %793 = vmatpush1.msra.mxu0 0.0
        %794 = vmatprep.subr.mxu0 0.0
        %795 = vmatpush1.msra.mxu0 0.0
        %796 = vmatprep.subr.mxu0 0.0
        %797 = vmatpush1.msra.mxu0 0.0
        %798 = vmatprep.subr.mxu0 0.0
        %799 = vmatpush1.msra.mxu0 0.0
        %800 = vmatprep.subr.mxu0 0.0
        %801 = vmatpush1.msra.mxu0 0.0
        %802 = vmatprep.subr.mxu0 0.0
        %803 = vmatpush1.msra.mxu0 0.0
        %804 = vmatprep.subr.mxu0 0.0
        %805 = vmatpush1.msra.mxu0 0.0
        %806 = vmatprep.subr.mxu0 0.0
        %807 = vmatpush1.msra.mxu0 0.0
        %808 = vmatprep.mubr.f32.mxu0 0.0
        %809 = vmatmul.mubr.f32.gmra.mrb[0].mxu0 %v502
        %v810 = vpop.f32.mrb[0].mxu0
        %v811 = vadd.f32 %v650, %v810
        %v812 = vpop.f32.mrb[0].mxu0
        %v813 = vadd.f32 %v652, %v812
        %814 = vmatprep.mubr.f32.mxu0 0.0
        %815 = vmatmul.mubr.f32.gmra.mrb[0].mxu0 %v503
        %v816 = vpop.f32.mrb[0].mxu0
        %v817 = vadd.f32 %v656, %v816
        %v818 = vpop.f32.mrb[0].mxu0
        %v819 = vadd.f32 %v658, %v818
        %820 = vmatprep.mubr.f32.mxu0 0.0
        %821 = vmatmul.mubr.f32.gmra.mrb[0].mxu0 %v504
        %v822 = vpop.f32.mrb[0].mxu0
        %v823 = vadd.f32 %v662, %v822
        %v824 = vpop.f32.mrb[0].mxu0
        %v825 = vadd.f32 %v664, %v824
        %826 = vmatprep.mubr.f32.mxu0 0.0
        %827 = vmatmul.mubr.f32.gmra.mrb[0].mxu0 %v505
        %v828 = vpop.f32.mrb[0].mxu0
        %v829 = vadd.f32 %v668, %v828
        %v830 = vpop.f32.mrb[0].mxu0
        %v831 = vadd.f32 %v670, %v830
        %832 = vmatprep.mubr.f32.mxu0 0.0
        %833 = vmatmul.mubr.f32.gmra.mrb[0].mxu0 %v506
        %v834 = vpop.f32.mrb[0].mxu0
        %v835 = vadd.f32 %v674, %v834
        %v836 = vpop.f32.mrb[0].mxu0
        %v837 = vadd.f32 %v676, %v836
        %838 = vmatprep.mubr.f32.mxu0 0.0
        %839 = vmatmul.mubr.f32.gmra.mrb[0].mxu0 %v507
        %v840 = vpop.f32.mrb[0].mxu0
        %v841 = vadd.f32 %v680, %v840
        %v842 = vpop.f32.mrb[0].mxu0
        %v843 = vadd.f32 %v682, %v842
        %844 = vmatprep.mubr.f32.mxu0 0.0
        %845 = vmatmul.mubr.f32.gmra.mrb[0].mxu0 %v508
        %v846 = vpop.f32.mrb[0].mxu0
        %v847 = vadd.f32 %v686, %v846
        %v848 = vpop.f32.mrb[0].mxu0
        %v849 = vadd.f32 %v688, %v848
        %850 = vmatprep.mubr.f32.mxu0 0.0
        %851 = vmatmul.mubr.f32.gmra.mrb[0].mxu0 %v509
        %v852 = vpop.f32.mrb[0].mxu0
        %v853 = vadd.f32 %v692, %v852
        %v854 = vpop.f32.mrb[0].mxu0
        %v855 = vadd.f32 %v694, %v854
        %856 = vmatprep.mubr.f32.mxu0 0.0
        %857 = vmatmul.mubr.f32.gmra.mrb[0].mxu0 %v510
        %v858 = vpop.f32.mrb[0].mxu0
        %v859 = vadd.f32 %v698, %v858
        %v860 = vpop.f32.mrb[0].mxu0
        %v861 = vadd.f32 %v700, %v860
        %862 = vmatprep.mubr.f32.mxu0 0.0
        %863 = vmatmul.mubr.f32.gmra.mrb[0].mxu0 %v511
        %v864 = vpop.f32.mrb[0].mxu0
        %v865 = vadd.f32 %v704, %v864
        %v866 = vpop.f32.mrb[0].mxu0
        %v867 = vadd.f32 %v706, %v866
        %868 = vmatprep.mubr.f32.mxu0 0.0
        %869 = vmatmul.mubr.f32.gmra.mrb[0].mxu0 %v512
        %v870 = vpop.f32.mrb[0].mxu0
        %v871 = vadd.f32 %v710, %v870
        %v872 = vpop.f32.mrb[0].mxu0
        %v873 = vadd.f32 %v712, %v872
        %874 = vmatprep.mubr.f32.mxu0 0.0
        %875 = vmatmul.mubr.f32.gmra.mrb[0].mxu0 %v513
        %v876 = vpop.f32.mrb[0].mxu0
        %v877 = vadd.f32 %v716, %v876
        %v878 = vpop.f32.mrb[0].mxu0
        %v879 = vadd.f32 %v718, %v878
        %880 = vmatprep.mubr.f32.mxu0 0.0
        %881 = vmatmul.mubr.f32.gmra.mrb[0].mxu0 %v514
        %v882 = vpop.f32.mrb[0].mxu0
        %v883 = vadd.f32 %v722, %v882
        %v884 = vpop.f32.mrb[0].mxu0
        %v885 = vadd.f32 %v724, %v884
        %886 = vmatprep.mubr.f32.mxu0 0.0
        %887 = vmatmul.mubr.f32.gmra.mrb[0].mxu0 %v515
        %v888 = vpop.f32.mrb[0].mxu0
        %v889 = vadd.f32 %v728, %v888
        %v890 = vpop.f32.mrb[0].mxu0
        %v891 = vadd.f32 %v730, %v890
        %892 = vmatprep.mubr.f32.mxu0 0.0
        %893 = vmatmul.mubr.f32.gmra.mrb[0].mxu0 %v516
        %v894 = vpop.f32.mrb[0].mxu0
        %v895 = vadd.f32 %v734, %v894
        %v896 = vpop.f32.mrb[0].mxu0
        %v897 = vadd.f32 %v736, %v896
        %898 = vmatprep.mubr.f32.mxu0 0.0
        %899 = vmatmul.mubr.f32.gmra.mrb[0].mxu0 %v517
        %v900 = vpop.f32.mrb[0].mxu0
        %v901 = vadd.f32 %v740, %v900
        %v902 = vpop.f32.mrb[0].mxu0
        %v903 = vadd.f32 %v742, %v902
        %904 = vdwg.mxu0
        %v905 = vld [vmem:[%s405] sm:$0xff]
        %v906 = vld [vmem:[%s405 + $0x8] sm:$0xff]
        %v907 = vld [vmem:[%s405 + $0x10] sm:$0xff]
        %v908 = vld [vmem:[%s405 + $0x18] sm:$0xff]
        %v909 = vld [vmem:[%s405 + $0x20] sm:$0xff]
        %v910 = vld [vmem:[%s405 + $0x28] sm:$0xff]
        %v911 = vld [vmem:[%s405 + $0x30] sm:$0xff]
        %v912 = vld [vmem:[%s405 + $0x38] sm:$0xff]
        %v913 = vld [vmem:[%s405 + $0x40] sm:$0xff]
        %v914 = vld [vmem:[%s405 + $0x48] sm:$0xff]
        %v915 = vld [vmem:[%s405 + $0x50] sm:$0xff]
        %v916 = vld [vmem:[%s405 + $0x58] sm:$0xff]
        %v917 = vld [vmem:[%s405 + $0x60] sm:$0xff]
        %v918 = vld [vmem:[%s405 + $0x68] sm:$0xff]
        %v919 = vld [vmem:[%s405 + $0x70] sm:$0xff]
        %v920 = vld [vmem:[%s405 + $0x78] sm:$0xff]
        %922 = vset.pattern.permute.xlu0 0
        %923 = vperm.xlu0 %922, %v905
        %v924 = vpop.permute.xlu0 %923
        %927 = vset.pattern.permute.xlu0 0
        %928 = vperm.xlu0 %927, %v906
        %v929 = vpop.permute.xlu0 %928
        %932 = vset.pattern.permute.xlu0 0
        %933 = vperm.xlu0 %932, %v907
        %v934 = vpop.permute.xlu0 %933
        %937 = vset.pattern.permute.xlu0 0
        %938 = vperm.xlu0 %937, %v908
        %v939 = vpop.permute.xlu0 %938
        %942 = vset.pattern.permute.xlu0 0
        %943 = vperm.xlu0 %942, %v909
        %v944 = vpop.permute.xlu0 %943
        %947 = vset.pattern.permute.xlu0 0
        %948 = vperm.xlu0 %947, %v910
        %v949 = vpop.permute.xlu0 %948
        %952 = vset.pattern.permute.xlu0 0
        %953 = vperm.xlu0 %952, %v911
        %v954 = vpop.permute.xlu0 %953
        %957 = vset.pattern.permute.xlu0 0
        %958 = vperm.xlu0 %957, %v912
        %v959 = vpop.permute.xlu0 %958
        %962 = vset.pattern.permute.xlu0 0
        %963 = vperm.xlu0 %962, %v913
        %v964 = vpop.permute.xlu0 %963
        %967 = vset.pattern.permute.xlu0 0
        %968 = vperm.xlu0 %967, %v914
        %v969 = vpop.permute.xlu0 %968
        %972 = vset.pattern.permute.xlu0 0
        %973 = vperm.xlu0 %972, %v915
        %v974 = vpop.permute.xlu0 %973
        %977 = vset.pattern.permute.xlu0 0
        %978 = vperm.xlu0 %977, %v916
        %v979 = vpop.permute.xlu0 %978
        %982 = vset.pattern.permute.xlu0 0
        %983 = vperm.xlu0 %982, %v917
        %v984 = vpop.permute.xlu0 %983
        %987 = vset.pattern.permute.xlu0 0
        %988 = vperm.xlu0 %987, %v918
        %v989 = vpop.permute.xlu0 %988
        %992 = vset.pattern.permute.xlu0 0
        %993 = vperm.xlu0 %992, %v919
        %v994 = vpop.permute.xlu0 %993
        %997 = vset.pattern.permute.xlu0 0
        %998 = vperm.xlu0 %997, %v920
        %v999 = vpop.permute.xlu0 %998
        %v1001 = vadd.f32 %v811, %v924
        %v1002 = vadd.f32 %v813, %v924
        %v1003 = vadd.f32 %v817, %v929
        %v1004 = vadd.f32 %v819, %v929
        %v1005 = vadd.f32 %v823, %v934
        %v1006 = vadd.f32 %v825, %v934
        %v1007 = vadd.f32 %v829, %v939
        %v1008 = vadd.f32 %v831, %v939
        %v1009 = vadd.f32 %v835, %v944
        %v1010 = vadd.f32 %v837, %v944
        %v1011 = vadd.f32 %v841, %v949
        %v1012 = vadd.f32 %v843, %v949
        %v1013 = vadd.f32 %v847, %v954
        %v1014 = vadd.f32 %v849, %v954
        %v1015 = vadd.f32 %v853, %v959
        %v1016 = vadd.f32 %v855, %v959
        %v1017 = vadd.f32 %v859, %v964
        %v1018 = vadd.f32 %v861, %v964
        %v1019 = vadd.f32 %v865, %v969
        %v1020 = vadd.f32 %v867, %v969
        %v1021 = vadd.f32 %v871, %v974
        %v1022 = vadd.f32 %v873, %v974
        %v1023 = vadd.f32 %v877, %v979
        %v1024 = vadd.f32 %v879, %v979
        %v1025 = vadd.f32 %v883, %v984
        %v1026 = vadd.f32 %v885, %v984
        %v1027 = vadd.f32 %v889, %v989
        %v1028 = vadd.f32 %v891, %v989
        %v1029 = vadd.f32 %v895, %v994
        %v1030 = vadd.f32 %v897, %v994
        %v1031 = vadd.f32 %v901, %v999
        %v1032 = vadd.f32 %v903, %v999
        %v1033 = vmax.f32 %v1001, 0.0
        %v1034 = vmax.f32 %v1002, 0.0
        %v1035 = vmax.f32 %v1003, 0.0
        %v1036 = vmax.f32 %v1004, 0.0
        %v1037 = vmax.f32 %v1005, 0.0
        %v1038 = vmax.f32 %v1006, 0.0
        %v1039 = vmax.f32 %v1007, 0.0
        %v1040 = vmax.f32 %v1008, 0.0
        %v1041 = vmax.f32 %v1009, 0.0
        %v1042 = vmax.f32 %v1010, 0.0
        %v1043 = vmax.f32 %v1011, 0.0
        %v1044 = vmax.f32 %v1012, 0.0
        %v1045 = vmax.f32 %v1013, 0.0
        %v1046 = vmax.f32 %v1014, 0.0
        %v1047 = vmax.f32 %v1015, 0.0
        %v1048 = vmax.f32 %v1016, 0.0
        %v1049 = vmax.f32 %v1017, 0.0
        %v1050 = vmax.f32 %v1018, 0.0
        %v1051 = vmax.f32 %v1019, 0.0
        %v1052 = vmax.f32 %v1020, 0.0
        %v1053 = vmax.f32 %v1021, 0.0
        %v1054 = vmax.f32 %v1022, 0.0
        %v1055 = vmax.f32 %v1023, 0.0
        %v1056 = vmax.f32 %v1024, 0.0
        %v1057 = vmax.f32 %v1025, 0.0
        %v1058 = vmax.f32 %v1026, 0.0
        %v1059 = vmax.f32 %v1027, 0.0
        %v1060 = vmax.f32 %v1028, 0.0
        %v1061 = vmax.f32 %v1029, 0.0
        %v1062 = vmax.f32 %v1030, 0.0
        %v1063 = vmax.f32 %v1031, 0.0
        %v1064 = vmax.f32 %v1032, 0.0
        %v1065 = vld [vmem:[#allocation3] sm:$0xff]
        %v1066 = vld [vmem:[#allocation3 + $0x8] sm:$0xff]
        %v1067 = vld [vmem:[#allocation3 + $0x10] sm:$0xff]
        %v1068 = vld [vmem:[#allocation3 + $0x18] sm:$0xff]
        %v1069 = vld [vmem:[#allocation3 + $0x20] sm:$0xff]
        %v1070 = vld [vmem:[#allocation3 + $0x28] sm:$0xff]
        %v1071 = vld [vmem:[#allocation3 + $0x30] sm:$0xff]
        %v1072 = vld [vmem:[#allocation3 + $0x38] sm:$0xff]
        %v1073 = vld [vmem:[#allocation3 + $0x40] sm:$0xff]
        %v1074 = vld [vmem:[#allocation3 + $0x48] sm:$0xff]
        %v1075 = vld [vmem:[#allocation3 + $0x50] sm:$0xff]
        %v1076 = vld [vmem:[#allocation3 + $0x58] sm:$0xff]
        %v1077 = vld [vmem:[#allocation3 + $0x60] sm:$0xff]
        %v1078 = vld [vmem:[#allocation3 + $0x68] sm:$0xff]
        %v1079 = vld [vmem:[#allocation3 + $0x70] sm:$0xff]
        %v1080 = vld [vmem:[#allocation3 + $0x78] sm:$0xff]
        %v1081 = vadd.f32 %v1033, %v1034
        %1082 = vadd.xlane.f32.xlu0 %v1081
        %v1083 = vpop.xlane.xlu0 %1082
        %v1084 = vadd.f32 %v1035, %v1036
        %1085 = vadd.xlane.f32.xlu0 %v1084
        %v1086 = vpop.xlane.xlu0 %1085
        %v1087 = vadd.f32 %v1037, %v1038
        %1088 = vadd.xlane.f32.xlu0 %v1087
        %v1089 = vpop.xlane.xlu0 %1088
        %v1090 = vadd.f32 %v1039, %v1040
        %1091 = vadd.xlane.f32.xlu0 %v1090
        %v1092 = vpop.xlane.xlu0 %1091
        %v1093 = vadd.f32 %v1041, %v1042
        %1094 = vadd.xlane.f32.xlu0 %v1093
        %v1095 = vpop.xlane.xlu0 %1094
        %v1096 = vadd.f32 %v1043, %v1044
        %1097 = vadd.xlane.f32.xlu0 %v1096
        %v1098 = vpop.xlane.xlu0 %1097
        %v1099 = vadd.f32 %v1045, %v1046
        %1100 = vadd.xlane.f32.xlu0 %v1099
        %v1101 = vpop.xlane.xlu0 %1100
        %v1102 = vadd.f32 %v1047, %v1048
        %1103 = vadd.xlane.f32.xlu0 %v1102
        %v1104 = vpop.xlane.xlu0 %1103
        %v1105 = vadd.f32 %v1049, %v1050
        %1106 = vadd.xlane.f32.xlu0 %v1105
        %v1107 = vpop.xlane.xlu0 %1106
        %v1108 = vadd.f32 %v1051, %v1052
        %1109 = vadd.xlane.f32.xlu0 %v1108
        %v1110 = vpop.xlane.xlu0 %1109
        %v1111 = vadd.f32 %v1053, %v1054
        %1112 = vadd.xlane.f32.xlu0 %v1111
        %v1113 = vpop.xlane.xlu0 %1112
        %v1114 = vadd.f32 %v1055, %v1056
        %1115 = vadd.xlane.f32.xlu0 %v1114
        %v1116 = vpop.xlane.xlu0 %1115
        %v1117 = vadd.f32 %v1057, %v1058
        %1118 = vadd.xlane.f32.xlu0 %v1117
        %v1119 = vpop.xlane.xlu0 %1118
        %v1120 = vadd.f32 %v1059, %v1060
        %1121 = vadd.xlane.f32.xlu0 %v1120
        %v1122 = vpop.xlane.xlu0 %1121
        %v1123 = vadd.f32 %v1061, %v1062
        %1124 = vadd.xlane.f32.xlu0 %v1123
        %v1125 = vpop.xlane.xlu0 %1124
        %v1126 = vadd.f32 %v1063, %v1064
        %1127 = vadd.xlane.f32.xlu0 %v1126
        %v1128 = vpop.xlane.xlu0 %1127
        %v1129 = vadd.f32 %v1065, %v1083
        %v1130 = vadd.f32 %v1066, %v1086
        %v1131 = vadd.f32 %v1067, %v1089
        %v1132 = vadd.f32 %v1068, %v1092
        %v1133 = vadd.f32 %v1069, %v1095
        %v1134 = vadd.f32 %v1070, %v1098
        %v1135 = vadd.f32 %v1071, %v1101
        %v1136 = vadd.f32 %v1072, %v1104
        %v1137 = vadd.f32 %v1073, %v1107
        %v1138 = vadd.f32 %v1074, %v1110
        %v1139 = vadd.f32 %v1075, %v1113
        %v1140 = vadd.f32 %v1076, %v1116
        %v1141 = vadd.f32 %v1077, %v1119
        %v1142 = vadd.f32 %v1078, %v1122
        %v1143 = vadd.f32 %v1079, %v1125
        %v1144 = vadd.f32 %v1080, %v1128
        %vm1145 = vcmask 7168
        %1146 = vst.msk [vmem:[#allocation3] sm:$0xff] %vm1145, %v1129
        %1147 = vst.msk [vmem:[#allocation3 + $0x8] sm:$0xff] %vm1145, %v1130
        %1148 = vst.msk [vmem:[#allocation3 + $0x10] sm:$0xff] %vm1145, %v1131
        %1149 = vst.msk [vmem:[#allocation3 + $0x18] sm:$0xff] %vm1145, %v1132
        %1150 = vst.msk [vmem:[#allocation3 + $0x20] sm:$0xff] %vm1145, %v1133
        %1151 = vst.msk [vmem:[#allocation3 + $0x28] sm:$0xff] %vm1145, %v1134
        %1152 = vst.msk [vmem:[#allocation3 + $0x30] sm:$0xff] %vm1145, %v1135
        %1153 = vst.msk [vmem:[#allocation3 + $0x38] sm:$0xff] %vm1145, %v1136
        %1154 = vst.msk [vmem:[#allocation3 + $0x40] sm:$0xff] %vm1145, %v1137
        %1155 = vst.msk [vmem:[#allocation3 + $0x48] sm:$0xff] %vm1145, %v1138
        %1156 = vst.msk [vmem:[#allocation3 + $0x50] sm:$0xff] %vm1145, %v1139
        %1157 = vst.msk [vmem:[#allocation3 + $0x58] sm:$0xff] %vm1145, %v1140
        %1158 = vst.msk [vmem:[#allocation3 + $0x60] sm:$0xff] %vm1145, %v1141
        %1159 = vst.msk [vmem:[#allocation3 + $0x68] sm:$0xff] %vm1145, %v1142
        %1160 = vst.msk [vmem:[#allocation3 + $0x70] sm:$0xff] %vm1145, %v1143
        %1161 = vst.msk [vmem:[#allocation3 + $0x78] sm:$0xff] %vm1145, %v1144
        %s1162 = smul.u32 %s23, 256
        %s1163 = sshra.s32 %s1162, 7
        %s1164 = sand.u32 %s1162, 127
        %s1165 = smul.addr %s1163, 8
        %s1166 = scalar_lea.vmem [#allocation2], %s1165
        %1167 = vst [vmem:[%s1166] sm:$0xff] %v1033
        %1168 = vst [vmem:[%s1166 + $0x8] sm:$0xff] %v1034
        %1169 = vst [vmem:[%s1166 + $0x10] sm:$0xff] %v1035
        %1170 = vst [vmem:[%s1166 + $0x18] sm:$0xff] %v1036
        %1171 = vst [vmem:[%s1166 + $0x20] sm:$0xff] %v1037
        %1172 = vst [vmem:[%s1166 + $0x28] sm:$0xff] %v1038
        %1173 = vst [vmem:[%s1166 + $0x30] sm:$0xff] %v1039
        %1174 = vst [vmem:[%s1166 + $0x38] sm:$0xff] %v1040
        %1175 = vst [vmem:[%s1166 + $0x40] sm:$0xff] %v1041
        %1176 = vst [vmem:[%s1166 + $0x48] sm:$0xff] %v1042
        %1177 = vst [vmem:[%s1166 + $0x50] sm:$0xff] %v1043
        %1178 = vst [vmem:[%s1166 + $0x58] sm:$0xff] %v1044
        %1179 = vst [vmem:[%s1166 + $0x60] sm:$0xff] %v1045
        %1180 = vst [vmem:[%s1166 + $0x68] sm:$0xff] %v1046
        %1181 = vst [vmem:[%s1166 + $0x70] sm:$0xff] %v1047
        %1182 = vst [vmem:[%s1166 + $0x78] sm:$0xff] %v1048
        %1183 = vst [vmem:[%s1166 + $0x80] sm:$0xff] %v1049
        %1184 = vst [vmem:[%s1166 + $0x88] sm:$0xff] %v1050
        %1185 = vst [vmem:[%s1166 + $0x90] sm:$0xff] %v1051
        %1186 = vst [vmem:[%s1166 + $0x98] sm:$0xff] %v1052
        %1187 = vst [vmem:[%s1166 + $0xa0] sm:$0xff] %v1053
        %1188 = vst [vmem:[%s1166 + $0xa8] sm:$0xff] %v1054
        %1189 = vst [vmem:[%s1166 + $0xb0] sm:$0xff] %v1055
        %1190 = vst [vmem:[%s1166 + $0xb8] sm:$0xff] %v1056
        %1191 = vst [vmem:[%s1166 + $0xc0] sm:$0xff] %v1057
        %1192 = vst [vmem:[%s1166 + $0xc8] sm:$0xff] %v1058
        %1193 = vst [vmem:[%s1166 + $0xd0] sm:$0xff] %v1059
        %1194 = vst [vmem:[%s1166 + $0xd8] sm:$0xff] %v1060
        %1195 = vst [vmem:[%s1166 + $0xe0] sm:$0xff] %v1061
        %1196 = vst [vmem:[%s1166 + $0xe8] sm:$0xff] %v1062
        %1197 = vst [vmem:[%s1166 + $0xf0] sm:$0xff] %v1063
        %1198 = vst [vmem:[%s1166 + $0xf8] sm:$0xff] %v1064
      $region48: #{bafm_cff_pallas.1} parent=39 // pred_fallthru
        _
      %p1199 = scmp.eq.s32.totalorder %s23, 1
      // Predicated region
      $region49: #{bafm_cff_pallas.1} parent=39 // pred_check
        %p1200 = pneg %p1199
      $region50: #{bafm_cff_pallas.1} parent=39 // pred_check_branch
        %1202 = sbr.rel (%p1200) target = $region52
      $region51: #{bafm_cff_pallas.1} parent=39 // pred_region
        %v1203 = vld [vmem:[#allocation3] sm:$0xff]
        %v1204 = vld [vmem:[#allocation3 + $0x8] sm:$0xff]
        %v1205 = vld [vmem:[#allocation3 + $0x10] sm:$0xff]
        %v1206 = vld [vmem:[#allocation3 + $0x18] sm:$0xff]
        %v1207 = vld [vmem:[#allocation3 + $0x20] sm:$0xff]
        %v1208 = vld [vmem:[#allocation3 + $0x28] sm:$0xff]
        %v1209 = vld [vmem:[#allocation3 + $0x30] sm:$0xff]
        %v1210 = vld [vmem:[#allocation3 + $0x38] sm:$0xff]
        %v1211 = vld [vmem:[#allocation3 + $0x40] sm:$0xff]
        %v1212 = vld [vmem:[#allocation3 + $0x48] sm:$0xff]
        %v1213 = vld [vmem:[#allocation3 + $0x50] sm:$0xff]
        %v1214 = vld [vmem:[#allocation3 + $0x58] sm:$0xff]
        %v1215 = vld [vmem:[#allocation3 + $0x60] sm:$0xff]
        %v1216 = vld [vmem:[#allocation3 + $0x68] sm:$0xff]
        %v1217 = vld [vmem:[#allocation3 + $0x70] sm:$0xff]
        %v1218 = vld [vmem:[#allocation3 + $0x78] sm:$0xff]
        %v1219 = vmul.f32 %v1203, 0.00390625
        %v1220 = vmul.f32 %v1204, 0.00390625
        %v1221 = vmul.f32 %v1205, 0.00390625
        %v1222 = vmul.f32 %v1206, 0.00390625
        %v1223 = vmul.f32 %v1207, 0.00390625
        %v1224 = vmul.f32 %v1208, 0.00390625
        %v1225 = vmul.f32 %v1209, 0.00390625
        %v1226 = vmul.f32 %v1210, 0.00390625
        %v1227 = vmul.f32 %v1211, 0.00390625
        %v1228 = vmul.f32 %v1212, 0.00390625
        %v1229 = vmul.f32 %v1213, 0.00390625
        %v1230 = vmul.f32 %v1214, 0.00390625
        %v1231 = vmul.f32 %v1215, 0.00390625
        %v1232 = vmul.f32 %v1216, 0.00390625
        %v1233 = vmul.f32 %v1217, 0.00390625
        %v1234 = vmul.f32 %v1218, 0.00390625
        %v1235 = vxor.u32 %v1219, 2147483648
        %v1236 = vxor.u32 %v1220, 2147483648
        %v1237 = vxor.u32 %v1221, 2147483648
        %v1238 = vxor.u32 %v1222, 2147483648
        %v1239 = vxor.u32 %v1223, 2147483648
        %v1240 = vxor.u32 %v1224, 2147483648
        %v1241 = vxor.u32 %v1225, 2147483648
        %v1242 = vxor.u32 %v1226, 2147483648
        %v1243 = vxor.u32 %v1227, 2147483648
        %v1244 = vxor.u32 %v1228, 2147483648
        %v1245 = vxor.u32 %v1229, 2147483648
        %v1246 = vxor.u32 %v1230, 2147483648
        %v1247 = vxor.u32 %v1231, 2147483648
        %v1248 = vxor.u32 %v1232, 2147483648
        %v1249 = vxor.u32 %v1233, 2147483648
        %v1250 = vxor.u32 %v1234, 2147483648
        %v1251 = vmul.f32 %v1235, 1.442695
        %v1252 = vpow.pop %v1251
        %v1253 = vmul.f32 %v1236, 1.442695
        %v1254 = vpow.pop %v1253
        %v1255 = vmul.f32 %v1237, 1.442695
        %v1256 = vpow.pop %v1255
        %v1257 = vmul.f32 %v1238, 1.442695
        %v1258 = vpow.pop %v1257
        %v1259 = vmul.f32 %v1239, 1.442695
        %v1260 = vpow.pop %v1259
        %v1261 = vmul.f32 %v1240, 1.442695
        %v1262 = vpow.pop %v1261
        %v1263 = vmul.f32 %v1241, 1.442695
        %v1264 = vpow.pop %v1263
        %v1265 = vmul.f32 %v1242, 1.442695
        %v1266 = vpow.pop %v1265
        %v1267 = vmul.f32 %v1243, 1.442695
        %v1268 = vpow.pop %v1267
        %v1269 = vmul.f32 %v1244, 1.442695
        %v1270 = vpow.pop %v1269
        %v1271 = vmul.f32 %v1245, 1.442695
        %v1272 = vpow.pop %v1271
        %v1273 = vmul.f32 %v1246, 1.442695
        %v1274 = vpow.pop %v1273
        %v1275 = vmul.f32 %v1247, 1.442695
        %v1276 = vpow.pop %v1275
        %v1277 = vmul.f32 %v1248, 1.442695
        %v1278 = vpow.pop %v1277
        %v1279 = vmul.f32 %v1249, 1.442695
        %v1280 = vpow.pop %v1279
        %v1281 = vmul.f32 %v1250, 1.442695
        %v1282 = vpow.pop %v1281
        %v1283 = vadd.f32 %v1252, 1.0
        %v1284 = vadd.f32 %v1254, 1.0
        %v1285 = vadd.f32 %v1256, 1.0
        %v1286 = vadd.f32 %v1258, 1.0
        %v1287 = vadd.f32 %v1260, 1.0
        %v1288 = vadd.f32 %v1262, 1.0
        %v1289 = vadd.f32 %v1264, 1.0
        %v1290 = vadd.f32 %v1266, 1.0
        %v1291 = vadd.f32 %v1268, 1.0
        %v1292 = vadd.f32 %v1270, 1.0
        %v1293 = vadd.f32 %v1272, 1.0
        %v1294 = vadd.f32 %v1274, 1.0
        %v1295 = vadd.f32 %v1276, 1.0
        %v1296 = vadd.f32 %v1278, 1.0
        %v1297 = vadd.f32 %v1280, 1.0
        %v1298 = vadd.f32 %v1282, 1.0
        %v1299 = vrcp.pop %v1283
        %v1300 = vmul.f32 1.0, %v1299
        %v1301 = vrcp.pop %v1284
        %v1302 = vmul.f32 1.0, %v1301
        %v1303 = vrcp.pop %v1285
        %v1304 = vmul.f32 1.0, %v1303
        %v1305 = vrcp.pop %v1286
        %v1306 = vmul.f32 1.0, %v1305
        %v1307 = vrcp.pop %v1287
        %v1308 = vmul.f32 1.0, %v1307
        %v1309 = vrcp.pop %v1288
        %v1310 = vmul.f32 1.0, %v1309
        %v1311 = vrcp.pop %v1289
        %v1312 = vmul.f32 1.0, %v1311
        %v1313 = vrcp.pop %v1290
        %v1314 = vmul.f32 1.0, %v1313
        %v1315 = vrcp.pop %v1291
        %v1316 = vmul.f32 1.0, %v1315
        %v1317 = vrcp.pop %v1292
        %v1318 = vmul.f32 1.0, %v1317
        %v1319 = vrcp.pop %v1293
        %v1320 = vmul.f32 1.0, %v1319
        %v1321 = vrcp.pop %v1294
        %v1322 = vmul.f32 1.0, %v1321
        %v1323 = vrcp.pop %v1295
        %v1324 = vmul.f32 1.0, %v1323
        %v1325 = vrcp.pop %v1296
        %v1326 = vmul.f32 1.0, %v1325
        %v1327 = vrcp.pop %v1297
        %v1328 = vmul.f32 1.0, %v1327
        %v1329 = vrcp.pop %v1298
        %v1330 = vmul.f32 1.0, %v1329
        %vm1331 = vcmask 7168
        %1332 = vst.msk [vmem:[#allocation4] sm:$0xff] %vm1331, %v1300
        %1333 = vst.msk [vmem:[#allocation4 + $0x8] sm:$0xff] %vm1331, %v1302
        %1334 = vst.msk [vmem:[#allocation4 + $0x10] sm:$0xff] %vm1331, %v1304
        %1335 = vst.msk [vmem:[#allocation4 + $0x18] sm:$0xff] %vm1331, %v1306
        %1336 = vst.msk [vmem:[#allocation4 + $0x20] sm:$0xff] %vm1331, %v1308
        %1337 = vst.msk [vmem:[#allocation4 + $0x28] sm:$0xff] %vm1331, %v1310
        %1338 = vst.msk [vmem:[#allocation4 + $0x30] sm:$0xff] %vm1331, %v1312
        %1339 = vst.msk [vmem:[#allocation4 + $0x38] sm:$0xff] %vm1331, %v1314
        %1340 = vst.msk [vmem:[#allocation4 + $0x40] sm:$0xff] %vm1331, %v1316
        %1341 = vst.msk [vmem:[#allocation4 + $0x48] sm:$0xff] %vm1331, %v1318
        %1342 = vst.msk [vmem:[#allocation4 + $0x50] sm:$0xff] %vm1331, %v1320
        %1343 = vst.msk [vmem:[#allocation4 + $0x58] sm:$0xff] %vm1331, %v1322
        %1344 = vst.msk [vmem:[#allocation4 + $0x60] sm:$0xff] %vm1331, %v1324
        %1345 = vst.msk [vmem:[#allocation4 + $0x68] sm:$0xff] %vm1331, %v1326
        %1346 = vst.msk [vmem:[#allocation4 + $0x70] sm:$0xff] %vm1331, %v1328
        %1347 = vst.msk [vmem:[#allocation4 + $0x78] sm:$0xff] %vm1331, %v1330
      $region52: #{bafm_cff_pallas.1} parent=39 // pred_fallthru
        _
      %p1348 = scmp.ge.s32.totalorder %s23, 1
      // Predicated region
      $region53: #{bafm_cff_pallas.1} parent=39 // pred_check
        %p1349 = pneg %p1348
      $region54: #{bafm_cff_pallas.1} parent=39 // pred_check_branch
        %1351 = sbr.rel (%p1349) target = $region56
      $region55: #{bafm_cff_pallas.1} parent=39 // pred_region
        %s1352 = ssub.s32 %s23, 1
        %s1353 = smul.u32 %s1352, 256
        %s1354 = sshra.s32 %s1353, 7
        %s1355 = sand.u32 %s1353, 127
        %s1356 = smul.addr %s1354, 8
        %s1357 = scalar_lea.vmem [#allocation2], %s1356
        %v1358 = vld [vmem:[%s1357] sm:$0xff]
        %v1359 = vld [vmem:[%s1357 + $0x8] sm:$0xff]
        %v1360 = vld [vmem:[%s1357 + $0x10] sm:$0xff]
        %v1361 = vld [vmem:[%s1357 + $0x18] sm:$0xff]
        %v1362 = vld [vmem:[%s1357 + $0x20] sm:$0xff]
        %v1363 = vld [vmem:[%s1357 + $0x28] sm:$0xff]
        %v1364 = vld [vmem:[%s1357 + $0x30] sm:$0xff]
        %v1365 = vld [vmem:[%s1357 + $0x38] sm:$0xff]
        %v1366 = vld [vmem:[%s1357 + $0x40] sm:$0xff]
        %v1367 = vld [vmem:[%s1357 + $0x48] sm:$0xff]
        %v1368 = vld [vmem:[%s1357 + $0x50] sm:$0xff]
        %v1369 = vld [vmem:[%s1357 + $0x58] sm:$0xff]
        %v1370 = vld [vmem:[%s1357 + $0x60] sm:$0xff]
        %v1371 = vld [vmem:[%s1357 + $0x68] sm:$0xff]
        %v1372 = vld [vmem:[%s1357 + $0x70] sm:$0xff]
        %v1373 = vld [vmem:[%s1357 + $0x78] sm:$0xff]
        %v1374 = vld [vmem:[%s1357 + $0x80] sm:$0xff]
        %v1375 = vld [vmem:[%s1357 + $0x88] sm:$0xff]
        %v1376 = vld [vmem:[%s1357 + $0x90] sm:$0xff]
        %v1377 = vld [vmem:[%s1357 + $0x98] sm:$0xff]
        %v1378 = vld [vmem:[%s1357 + $0xa0] sm:$0xff]
        %v1379 = vld [vmem:[%s1357 + $0xa8] sm:$0xff]
        %v1380 = vld [vmem:[%s1357 + $0xb0] sm:$0xff]
        %v1381 = vld [vmem:[%s1357 + $0xb8] sm:$0xff]
        %v1382 = vld [vmem:[%s1357 + $0xc0] sm:$0xff]
        %v1383 = vld [vmem:[%s1357 + $0xc8] sm:$0xff]
        %v1384 = vld [vmem:[%s1357 + $0xd0] sm:$0xff]
        %v1385 = vld [vmem:[%s1357 + $0xd8] sm:$0xff]
        %v1386 = vld [vmem:[%s1357 + $0xe0] sm:$0xff]
        %v1387 = vld [vmem:[%s1357 + $0xe8] sm:$0xff]
        %v1388 = vld [vmem:[%s1357 + $0xf0] sm:$0xff]
        %v1389 = vld [vmem:[%s1357 + $0xf8] sm:$0xff]
        %v1390 = vld [vmem:[#allocation4] sm:$0xff]
        %v1391 = vld [vmem:[#allocation4 + $0x8] sm:$0xff]
        %v1392 = vld [vmem:[#allocation4 + $0x10] sm:$0xff]
        %v1393 = vld [vmem:[#allocation4 + $0x18] sm:$0xff]
        %v1394 = vld [vmem:[#allocation4 + $0x20] sm:$0xff]
        %v1395 = vld [vmem:[#allocation4 + $0x28] sm:$0xff]
        %v1396 = vld [vmem:[#allocation4 + $0x30] sm:$0xff]
        %v1397 = vld [vmem:[#allocation4 + $0x38] sm:$0xff]
        %v1398 = vld [vmem:[#allocation4 + $0x40] sm:$0xff]
        %v1399 = vld [vmem:[#allocation4 + $0x48] sm:$0xff]
        %v1400 = vld [vmem:[#allocation4 + $0x50] sm:$0xff]
        %v1401 = vld [vmem:[#allocation4 + $0x58] sm:$0xff]
        %v1402 = vld [vmem:[#allocation4 + $0x60] sm:$0xff]
        %v1403 = vld [vmem:[#allocation4 + $0x68] sm:$0xff]
        %v1404 = vld [vmem:[#allocation4 + $0x70] sm:$0xff]
        %v1405 = vld [vmem:[#allocation4 + $0x78] sm:$0xff]
        %1407 = vset.pattern.permute.xlu0 0
        %1408 = vperm.xlu0 %1407, %v1390
        %v1409 = vpop.permute.xlu0 %1408
        %1412 = vset.pattern.permute.xlu0 0
        %1413 = vperm.xlu0 %1412, %v1391
        %v1414 = vpop.permute.xlu0 %1413
        %1417 = vset.pattern.permute.xlu0 0
        %1418 = vperm.xlu0 %1417, %v1392
        %v1419 = vpop.permute.xlu0 %1418
        %1422 = vset.pattern.permute.xlu0 0
        %1423 = vperm.xlu0 %1422, %v1393
        %v1424 = vpop.permute.xlu0 %1423
        %1427 = vset.pattern.permute.xlu0 0
        %1428 = vperm.xlu0 %1427, %v1394
        %v1429 = vpop.permute.xlu0 %1428
        %1432 = vset.pattern.permute.xlu0 0
        %1433 = vperm.xlu0 %1432, %v1395
        %v1434 = vpop.permute.xlu0 %1433
        %1437 = vset.pattern.permute.xlu0 0
        %1438 = vperm.xlu0 %1437, %v1396
        %v1439 = vpop.permute.xlu0 %1438
        %1442 = vset.pattern.permute.xlu0 0
        %1443 = vperm.xlu0 %1442, %v1397
        %v1444 = vpop.permute.xlu0 %1443
        %1447 = vset.pattern.permute.xlu0 0
        %1448 = vperm.xlu0 %1447, %v1398
        %v1449 = vpop.permute.xlu0 %1448
        %1452 = vset.pattern.permute.xlu0 0
        %1453 = vperm.xlu0 %1452, %v1399
        %v1454 = vpop.permute.xlu0 %1453
        %1457 = vset.pattern.permute.xlu0 0
        %1458 = vperm.xlu0 %1457, %v1400
        %v1459 = vpop.permute.xlu0 %1458
        %1462 = vset.pattern.permute.xlu0 0
        %1463 = vperm.xlu0 %1462, %v1401
        %v1464 = vpop.permute.xlu0 %1463
        %1467 = vset.pattern.permute.xlu0 0
        %1468 = vperm.xlu0 %1467, %v1402
        %v1469 = vpop.permute.xlu0 %1468
        %1472 = vset.pattern.permute.xlu0 0
        %1473 = vperm.xlu0 %1472, %v1403
        %v1474 = vpop.permute.xlu0 %1473
        %1477 = vset.pattern.permute.xlu0 0
        %1478 = vperm.xlu0 %1477, %v1404
        %v1479 = vpop.permute.xlu0 %1478
        %1482 = vset.pattern.permute.xlu0 0
        %1483 = vperm.xlu0 %1482, %v1405
        %v1484 = vpop.permute.xlu0 %1483
        %v1486 = vmul.f32 %v1358, %v1409
        %v1487 = vmul.f32 %v1359, %v1409
        %v1488 = vmul.f32 %v1360, %v1414
        %v1489 = vmul.f32 %v1361, %v1414
        %v1490 = vmul.f32 %v1362, %v1419
        %v1491 = vmul.f32 %v1363, %v1419
        %v1492 = vmul.f32 %v1364, %v1424
        %v1493 = vmul.f32 %v1365, %v1424
        %v1494 = vmul.f32 %v1366, %v1429
        %v1495 = vmul.f32 %v1367, %v1429
        %v1496 = vmul.f32 %v1368, %v1434
        %v1497 = vmul.f32 %v1369, %v1434
        %v1498 = vmul.f32 %v1370, %v1439
        %v1499 = vmul.f32 %v1371, %v1439
        %v1500 = vmul.f32 %v1372, %v1444
        %v1501 = vmul.f32 %v1373, %v1444
        %v1502 = vmul.f32 %v1374, %v1449
        %v1503 = vmul.f32 %v1375, %v1449
        %v1504 = vmul.f32 %v1376, %v1454
        %v1505 = vmul.f32 %v1377, %v1454
        %v1506 = vmul.f32 %v1378, %v1459
        %v1507 = vmul.f32 %v1379, %v1459
        %v1508 = vmul.f32 %v1380, %v1464
        %v1509 = vmul.f32 %v1381, %v1464
        %v1510 = vmul.f32 %v1382, %v1469
        %v1511 = vmul.f32 %v1383, %v1469
        %v1512 = vmul.f32 %v1384, %v1474
        %v1513 = vmul.f32 %v1385, %v1474
        %v1514 = vmul.f32 %v1386, %v1479
        %v1515 = vmul.f32 %v1387, %v1479
        %v1516 = vmul.f32 %v1388, %v1484
        %v1517 = vmul.f32 %v1389, %v1484
        %1518 = vst [vmem:[%s423] sm:$0xff] %v1486
        %1519 = vst [vmem:[%s423 + $0x8] sm:$0xff] %v1487
        %1520 = vst [vmem:[%s423 + $0x10] sm:$0xff] %v1488
        %1521 = vst [vmem:[%s423 + $0x18] sm:$0xff] %v1489
        %1522 = vst [vmem:[%s423 + $0x20] sm:$0xff] %v1490
        %1523 = vst [vmem:[%s423 + $0x28] sm:$0xff] %v1491
        %1524 = vst [vmem:[%s423 + $0x30] sm:$0xff] %v1492
        %1525 = vst [vmem:[%s423 + $0x38] sm:$0xff] %v1493
        %1526 = vst [vmem:[%s423 + $0x40] sm:$0xff] %v1494
        %1527 = vst [vmem:[%s423 + $0x48] sm:$0xff] %v1495
        %1528 = vst [vmem:[%s423 + $0x50] sm:$0xff] %v1496
        %1529 = vst [vmem:[%s423 + $0x58] sm:$0xff] %v1497
        %1530 = vst [vmem:[%s423 + $0x60] sm:$0xff] %v1498
        %1531 = vst [vmem:[%s423 + $0x68] sm:$0xff] %v1499
        %1532 = vst [vmem:[%s423 + $0x70] sm:$0xff] %v1500
        %1533 = vst [vmem:[%s423 + $0x78] sm:$0xff] %v1501
        %1534 = vst [vmem:[%s423 + $0x80] sm:$0xff] %v1502
        %1535 = vst [vmem:[%s423 + $0x88] sm:$0xff] %v1503
        %1536 = vst [vmem:[%s423 + $0x90] sm:$0xff] %v1504
        %1537 = vst [vmem:[%s423 + $0x98] sm:$0xff] %v1505
        %1538 = vst [vmem:[%s423 + $0xa0] sm:$0xff] %v1506
        %1539 = vst [vmem:[%s423 + $0xa8] sm:$0xff] %v1507
        %1540 = vst [vmem:[%s423 + $0xb0] sm:$0xff] %v1508
        %1541 = vst [vmem:[%s423 + $0xb8] sm:$0xff] %v1509
        %1542 = vst [vmem:[%s423 + $0xc0] sm:$0xff] %v1510
        %1543 = vst [vmem:[%s423 + $0xc8] sm:$0xff] %v1511
        %1544 = vst [vmem:[%s423 + $0xd0] sm:$0xff] %v1512
        %1545 = vst [vmem:[%s423 + $0xd8] sm:$0xff] %v1513
        %1546 = vst [vmem:[%s423 + $0xe0] sm:$0xff] %v1514
        %1547 = vst [vmem:[%s423 + $0xe8] sm:$0xff] %v1515
        %1548 = vst [vmem:[%s423 + $0xf0] sm:$0xff] %v1516
        %1549 = vst [vmem:[%s423 + $0xf8] sm:$0xff] %v1517
      $region56: #{bafm_cff_pallas.1} parent=39 // pred_fallthru
        _
      %s1550 = ssub.s32 %s23, 1
      %p1551 = scmp.gt.s32.totalorder %s1550, 0
      %s1552 = scalar_select %p1551, %s1550, 0
      %s1553 = smul.u32 16, %s22
      %s1554 = smul.u32 2, %s1552
      %p1555 = scmp.lt.s32.totalorder %s21, 1
      %s1556 = scalar_select %p1555, %s21, 1
      %p1557 = scmp.lt.s32.totalorder %s1553, 15
      %s1558 = scalar_select %p1557, %s1553, 15
      %p1559 = scmp.lt.s32.totalorder %s1554, 1
      %s1560 = scalar_select %p1559, %s1554, 1
      %s1561 = smul.addr %s1558, 2
      %s1562 = sadd.s32 %s1560, %s1561
      %s1563 = smul.addr %s1556, 32
      %s1564 = sadd.s32 %s1562, %s1563
      %s1565 = smul.addr %s1564, 8
      %s1566 = scalar_lea.vmem %s5, %s1565
      // Predicated region
      $region57: #{bafm_cff_pallas.1} parent=39 // pred_check
        %p1567 = pneg %p205
      $region58: #{bafm_cff_pallas.1} parent=39 // pred_check_branch
        %1569 = sbr.rel (%p1567) target = $region60
      $region59: #{bafm_cff_pallas.1} parent=39 // pred_region
        %s1570 = ssub.s32 %s23, 1
        %p1571 = scmp.gt.s32.totalorder %s1570, 0
        %s1572 = scalar_select %p1571, %s1570, 0
        %s1573 = smul.u32 16, %s22
        %s1574 = smul.u32 2, %s1572
      $region60: #{bafm_cff_pallas.1} parent=39 // pred_fallthru
        _
    $region40: #{bafm_cff_pallas.1} parent=5 // pred_fallthru
      _
    %p1575 = scmp.le.s32.totalorder 2, %s11
    // Predicated region
    $region61: #{bafm_cff_pallas.1} parent=5 // pred_check
      %p1576 = pneg %p1575
    $region62: #{bafm_cff_pallas.1} parent=5 // pred_check_branch
      %1578 = sbr.rel (%p1576) target = $region64
    $region63: #{bafm_cff_pallas.1} parent=5 // pred_region
      %s1579 = ssub.s32 %s11, 2
      // Predicated region
      $region65: #{bafm_cff_pallas.1} parent=63 // pred_check
        %p1580 = pneg %p211
      $region66: #{bafm_cff_pallas.1} parent=63 // pred_check_branch
        %1582 = sbr.rel (%p1580) target = $region68
      $region67: #{bafm_cff_pallas.1} parent=63 // pred_region
        %s1583 = ssub.s32 %s26, 1
        %p1584 = scmp.gt.s32.totalorder %s1583, 0
        %s1585 = scalar_select %p1584, %s1583, 0
        %s1586 = smul.u32 16, %s25
        %s1587 = smul.u32 2, %s1585
        %p1588 = scmp.lt.s32.totalorder %s24, 1
        %s1589 = scalar_select %p1588, %s24, 1
        %p1590 = scmp.lt.s32.totalorder %s1586, 15
        %s1591 = scalar_select %p1590, %s1586, 15
        %p1592 = scmp.lt.s32.totalorder %s1587, 1
        %s1593 = scalar_select %p1592, %s1587, 1
        %s1594 = smul.addr %s1591, 2
        %s1595 = sadd.s32 %s1593, %s1594
        %s1596 = smul.addr %s1589, 32
        %s1597 = sadd.s32 %s1595, %s1596
        %s1598 = smul.addr %s1597, 8
        %s1599 = scalar_lea.vmem %s5, %s1598
      $region68: #{bafm_cff_pallas.1} parent=63 // pred_fallthru
        _
    $region64: #{bafm_cff_pallas.1} parent=5 // pred_fallthru
      _
  $region6: #{bafm_cff_pallas.1} parent=0 // loop_footer
    %s15 = sadd.s32 1, %s11
  $region7: #{bafm_cff_pallas.1} parent=0 // loop_footer_branch
    %10 = sbr.rel target = $region3
  $region8: #{bafm_cff_pallas.1} parent=0 // loop_exit
    _

</llo_original>
